<compile_context>
chip_gen: v7x
topology: tpu7x:2x2x1
jax: 0.10.0
libtpu: 0.0.40
codegen_flags: <defaults>
</compile_context>

<pallas_src>
import math
import functools

import jax
import jax.numpy as jnp
from jax.experimental import pallas as pl
from jax.experimental.pallas import tpu as pltpu

LRELU_SLOPE = 0.2
LRELU_GAIN = math.sqrt(2.0)          # fused_leaky_relu gain
RESIDUAL_SCALE = 0.1                 # result_w = x + 0.1 * wmapper(...)

_VMEM = pl.BlockSpec(memory_space=pltpu.MemorySpace.VMEM)


def _fused_lrelu(y):
    # leaky_relu(y) * gain with the gain folded into the select constants
    # -> one select + one mul per element (no separate gain multiply).
    return y * jnp.where(y >= 0.0, LRELU_GAIN, LRELU_GAIN * LRELU_SLOPE)


def _eql(h_f32, w_ref, b_ref):
    """EqualLinear with pre-scaled bf16 weight, f32 accumulation, fused lrelu."""
    y = jnp.dot(h_f32.astype(jnp.bfloat16), w_ref[...],
                preferred_element_type=jnp.float32)
    return _fused_lrelu(y + b_ref[...])


# ----------------------------------------------------------------------------
# Fused kernel: PasswordMapper + WMapper + residual, full result_w output.
#   x_ref : [B*L, D]   (lane-dense W+ latents, f32)
#   p_ref : [B, P]     (password, f32)
#   weights: bf16, EqualLinear scale pre-folded; biases: f32 [1, D]
#   out_ref: [B*L, D]
# ----------------------------------------------------------------------------
def latent_mapper_kernel(x_ref, p_ref,
                         pw0, pb0, pw1, pb1, pw2, pb2, pw3, pb3,
                         ww0x, ww0p, wb0, ww1, wb1, ww2, wb2, ww3, wb3,
                         out_ref, *, batch, n_layers, start_layer,
                         mapping_layers):
    B, L, ML, start = batch, n_layers, mapping_layers, start_layer

    # ---- PasswordMapper: PixelNorm + 4 x EqualLinear(+fused lrelu) ----------
    pw = p_ref[...].astype(jnp.float32)
    pw = pw * jax.lax.rsqrt(jnp.mean(pw * pw, axis=-1, keepdims=True) + 1e-8)
    h = pw
    for (w, b) in ((pw0, pb0), (pw1, pb1), (pw2, pb2), (pw3, pb3)):
        h = _eql(h, w, b)
    pemb = h                                                    # [B, D] f32

    # ---- WMapper layer-0, password half: ONCE per batch row ----------------
    # Bias of layer 0 folded in here (computed on [B, D], not [B*ML, D]).
    pcb = jnp.dot(pemb.astype(jnp.bfloat16), ww0p[...],
                  preferred_element_type=jnp.float32) + wb0[...]   # [B, D]
    D = pcb.shape[-1]

    # ---- Gather the mapped rows of every batch into one [B*ML, D] tile -----
    xm = jnp.concatenate(
        [x_ref[b * L + start: b * L + start + ML, :] for b in range(B)],
        axis=0).astype(jnp.float32)                             # [B*ML, D]
    pcb_rows = jnp.concatenate(
        [jnp.broadcast_to(pcb[b:b + 1, :], (ML, D)) for b in range(B)],
        axis=0)                                                 # [B*ML, D]

    # ---- Pass-through for the unmapped style layers (exact f32 copy) -------
    out_ref[...] = x_ref[...]

    # ---- WMapper MLP on the mapped rows (single matmul per layer) ----------
    h = jnp.dot(xm.astype(jnp.bfloat16), ww0x[...],
                preferred_element_type=jnp.float32)
    h = _fused_lrelu(h + pcb_rows)
    for (w, b) in ((ww1, wb1), (ww2, wb2), (ww3, wb3)):
        h = _eql(h, w, b)

    # ---- Residual add (f32) and write only the mapped rows ------------------
    res = xm + RESIDUAL_SCALE * h                               # [B*ML, D] f32
    for b in range(B):
        out_ref[b * L + start: b * L + start + ML, :] = (
            res[b * ML:(b + 1) * ML, :].astype(out_ref.dtype))


# ----------------------------------------------------------------------------
# Forward wrapper: one pallas_call, everything resident in VMEM.
# ----------------------------------------------------------------------------
@functools.partial(jax.jit, static_argnums=(3, 4))
def latent_mapper_forward(kparams, x, p, start_layer=5, mapping_layers=4):
    """x: [B, L, D] W+ latents; p: [B, P] password. Returns (result_w, None)."""
    B, L, D = x.shape
    x2d = x.reshape(B * L, D)                       # lane-dense view, free

    kernel = functools.partial(latent_mapper_kernel, batch=B, n_layers=L,
                               start_layer=start_layer,
                               mapping_layers=mapping_layers)
    n_in = 2 + len(kparams)
    out2d = pl.pallas_call(
        kernel,
        out_shape=jax.ShapeDtypeStruct((B * L, D), x.dtype),
        in_specs=[_VMEM] * n_in,
        out_specs=_VMEM,
    )(x2d, p, *kparams)

    result_w = out2d.reshape(B, L, D)
    # TODO(synk): self.decoder (StyleGAN2 Generator) synthesis not translated.
    result_img = None
    return result_w, result_img


# ----------------------------------------------------------------------------
# Parameter handling
# ----------------------------------------------------------------------------
def _pairs(flat):
    return list(zip(flat[0::2], flat[1::2]))


def init_params(key, P, D):
    """Canonical f32 parameters (torch-like: unscaled weights, real biases)."""
    def linear(k, din, dout):
        kw, kb = jax.random.split(k)
        w = jax.random.normal(kw, (din, dout), jnp.float32)     # [in, out]
        b = 0.1 * jax.random.normal(kb, (1, dout), jnp.float32)
        return w, b

    keys = jax.random.split(key, 8)
    pw_dims = [(P, D), (D, D), (D, D), (D, D)]
    wm_dims = [(2 * D, D), (D, D), (D, D), (D, D)]
    pw_flat, wm_flat = [], []
    for k, (din, dout) in zip(keys[:4], pw_dims):
        w, b = linear(k, din, dout)
        pw_flat += [w, b]
    for k, (din, dout) in zip(keys[4:], wm_dims):
        w, b = linear(k, din, dout)
        wm_flat += [w, b]
    return {"password_mapper": pw_flat, "w_mapper": wm_flat}


def prepare_kernel_params(params):
    """Pre-fold EqualLinear scale, cast weights to bf16, split WMapper w0."""
    def prep(w, b):
        scale = 1.0 / math.sqrt(w.shape[0])
        return (w * scale).astype(jnp.bfloat16), b.astype(jnp.float32)

    flat = []
    for (w, b) in _pairs(params["password_mapper"]):
        ws, bs = prep(w, b)
        flat += [ws, bs]

    wm = _pairs(params["w_mapper"])
    w0, b0 = wm[0]
    D = w0.shape[0] // 2
    s0 = 1.0 / math.sqrt(w0.shape[0])               # in_dim = 2D
    flat += [(w0[:D] * s0).astype(jnp.bfloat16),    # w0_x
             (w0[D:] * s0).astype(jnp.bfloat16),    # w0_p
             b0.astype(jnp.float32)]
    for (w, b) in wm[1:]:
        ws, bs = prep(w, b)
        flat += [ws, bs]
    return tuple(flat)


# ----------------------------------------------------------------------------
# Pure-JAX f32 reference (original formulation, for numerical sanity check)
# ----------------------------------------------------------------------------
def _ref_mlp(h, pairs):
    for w, b in pairs:
        y = h @ (w * (1.0 / math.sqrt(w.shape[0]))) + b
        h = jnp.where(y >= 0.0, y, LRELU_SLOPE * y) * LRELU_GAIN
    return h


def _ref_forward(params, x, p, start_layer, mapping_layers):
    B, L, D = x.shape
    pn = p * jax.lax.rsqrt(jnp.mean(p * p, axis=-1, keepdims=True) + 1e-8)
    pemb = _ref_mlp(pn, _pairs(params["password_mapper"]))
    ML = mapping_layers
    xm = x[:, start_layer:start_layer + ML].reshape(B * ML, D)
    xcat = jnp.concatenate([xm, jnp.repeat(pemb, ML, axis=0)], axis=-1)
    delta = _ref_mlp(xcat, _pairs(params["w_mapper"])).reshape(B, ML, D)
    return x.at[:, start_layer:start_layer + ML].add(RESIDUAL_SCALE * delta)


# ----------------------------------------------------------------------------
if __name__ == "__main__":
    # Small but lane-aligned shapes (real StyleGAN2 mapper uses L=18, D=512).
    B, L, D, P = 2, 18, 128, 128
    start_layer, mapping_layers = 5, 4

    key = jax.random.PRNGKey(0)
    kx, kp, kparam = jax.random.split(key, 3)
    x = jax.random.normal(kx, (B, L, D), jnp.float32)
    p = jax.random.normal(kp, (B, P), jnp.float32)

    params = init_params(kparam, P, D)
    kparams = prepare_kernel_params(params)

    ref_w = _ref_forward(params, x, p, start_layer, mapping_layers)

    result_w, result_img = latent_mapper_forward(kparams, x, p,
                                                 start_layer, mapping_layers)
    result_w = jax.block_until_ready(result_w)

    assert result_w.shape == (B, L, D)
    assert result_img is None
    # bf16 matmul path vs f32 reference: loose-ish tolerance.
    assert jnp.allclose(result_w, ref_w, atol=2e-2, rtol=2e-2), \
        float(jnp.max(jnp.abs(result_w - ref_w)))
    # Unmapped layers must be an exact pass-through of x.
    mask = jnp.ones((L,), bool).at[start_layer:start_layer + mapping_layers].set(False)
    assert jnp.array_equal(result_w[:, mask], x[:, mask])

    print("KERNEL_OK")
</pallas_src>

<mosaic_0001>
module attributes {stable_mosaic.version = 11 : i64} {
  func.func @latent_mapper_kernel(%arg0: memref<36x128xf32, #tpu.memory_space<vmem>>, %arg1: memref<2x128xf32, #tpu.memory_space<vmem>>, %arg2: memref<128x128xbf16, #tpu.memory_space<vmem>>, %arg3: memref<1x128xf32, #tpu.memory_space<vmem>>, %arg4: memref<128x128xbf16, #tpu.memory_space<vmem>>, %arg5: memref<1x128xf32, #tpu.memory_space<vmem>>, %arg6: memref<128x128xbf16, #tpu.memory_space<vmem>>, %arg7: memref<1x128xf32, #tpu.memory_space<vmem>>, %arg8: memref<128x128xbf16, #tpu.memory_space<vmem>>, %arg9: memref<1x128xf32, #tpu.memory_space<vmem>>, %arg10: memref<128x128xbf16, #tpu.memory_space<vmem>>, %arg11: memref<128x128xbf16, #tpu.memory_space<vmem>>, %arg12: memref<1x128xf32, #tpu.memory_space<vmem>>, %arg13: memref<128x128xbf16, #tpu.memory_space<vmem>>, %arg14: memref<1x128xf32, #tpu.memory_space<vmem>>, %arg15: memref<128x128xbf16, #tpu.memory_space<vmem>>, %arg16: memref<1x128xf32, #tpu.memory_space<vmem>>, %arg17: memref<128x128xbf16, #tpu.memory_space<vmem>>, %arg18: memref<1x128xf32, #tpu.memory_space<vmem>>, %arg19: memref<36x128xf32, #tpu.memory_space<vmem>>) attributes {dimension_semantics = [], scalar_prefetch = 0 : i64, scratch_operands = 0 : i64, tpu.core_type = #tpu.core_type<tc>} {
    %c0 = arith.constant 0 : index
    %c0_0 = arith.constant 0 : index
    %0 = vector.load %arg1[%c0, %c0_0] : memref<2x128xf32, #tpu.memory_space<vmem>>, vector<2x128xf32>
    %1 = arith.mulf %0, %0 : vector<2x128xf32>
    %cst = arith.constant dense<0.000000e+00> : vector<2xf32>
    %2 = vector.multi_reduction <add>, %1, %cst [1] : vector<2x128xf32> to vector<2xf32>
    %3 = vector.shape_cast %2 : vector<2xf32> to vector<2x1xf32>
    %cst_1 = arith.constant 1.280000e+02 : f32
    %4 = vector.broadcast %cst_1 : f32 to vector<2x1xf32>
    %5 = arith.divf %3, %4 : vector<2x1xf32>
    %cst_2 = arith.constant 9.99999993E-9 : f32
    %6 = vector.broadcast %cst_2 : f32 to vector<2x1xf32>
    %7 = arith.addf %5, %6 : vector<2x1xf32>
    %8 = math.rsqrt %7 : vector<2x1xf32>
    %9 = vector.broadcast %8 : vector<2x1xf32> to vector<2x128xf32>
    %10 = arith.mulf %0, %9 : vector<2x128xf32>
    %11 = arith.truncf %10 : vector<2x128xf32> to vector<2x128xbf16>
    %c0_3 = arith.constant 0 : index
    %c0_4 = arith.constant 0 : index
    %12 = vector.load %arg2[%c0_3, %c0_4] : memref<128x128xbf16, #tpu.memory_space<vmem>>, vector<128x128xbf16>
    %cst_5 = arith.constant dense<0.000000e+00> : vector<2x128xf32>
    %13 = tpu.matmul %11, %12, %cst_5 {dimension_numbers = #tpu.dot_dimension_numbers<[1], [0], [0], [1], [0, 0, 1, 1], [], []>} : vector<2x128xbf16>, vector<128x128xbf16>, vector<2x128xf32> -> vector<2x128xf32>
    %c0_6 = arith.constant 0 : index
    %c0_7 = arith.constant 0 : index
    %14 = vector.load %arg3[%c0_6, %c0_7] : memref<1x128xf32, #tpu.memory_space<vmem>>, vector<1x128xf32>
    %15 = vector.broadcast %14 : vector<1x128xf32> to vector<2x128xf32>
    %16 = arith.addf %13, %15 : vector<2x128xf32>
    %cst_8 = arith.constant 0.000000e+00 : f32
    %17 = vector.broadcast %cst_8 : f32 to vector<2x128xf32>
    %18 = arith.cmpf oge, %16, %17 : vector<2x128xf32>
    %cst_9 = arith.constant 1.41421354 : f32
    %cst_10 = arith.constant 0.282842726 : f32
    %19 = vector.broadcast %cst_9 : f32 to vector<2x128xf32>
    %20 = vector.broadcast %cst_10 : f32 to vector<2x128xf32>
    %21 = arith.select %18, %19, %20 : vector<2x128xi1>, vector<2x128xf32>
    %22 = arith.mulf %16, %21 : vector<2x128xf32>
    %23 = arith.truncf %22 : vector<2x128xf32> to vector<2x128xbf16>
    %c0_11 = arith.constant 0 : index
    %c0_12 = arith.constant 0 : index
    %24 = vector.load %arg4[%c0_11, %c0_12] : memref<128x128xbf16, #tpu.memory_space<vmem>>, vector<128x128xbf16>
    %cst_13 = arith.constant dense<0.000000e+00> : vector<2x128xf32>
    %25 = tpu.matmul %23, %24, %cst_13 {dimension_numbers = #tpu.dot_dimension_numbers<[1], [0], [0], [1], [0, 0, 1, 1], [], []>} : vector<2x128xbf16>, vector<128x128xbf16>, vector<2x128xf32> -> vector<2x128xf32>
    %c0_14 = arith.constant 0 : index
    %c0_15 = arith.constant 0 : index
    %26 = vector.load %arg5[%c0_14, %c0_15] : memref<1x128xf32, #tpu.memory_space<vmem>>, vector<1x128xf32>
    %27 = vector.broadcast %26 : vector<1x128xf32> to vector<2x128xf32>
    %28 = arith.addf %25, %27 : vector<2x128xf32>
    %cst_16 = arith.constant 0.000000e+00 : f32
    %29 = vector.broadcast %cst_16 : f32 to vector<2x128xf32>
    %30 = arith.cmpf oge, %28, %29 : vector<2x128xf32>
    %cst_17 = arith.constant 1.41421354 : f32
    %cst_18 = arith.constant 0.282842726 : f32
    %31 = vector.broadcast %cst_17 : f32 to vector<2x128xf32>
    %32 = vector.broadcast %cst_18 : f32 to vector<2x128xf32>
    %33 = arith.select %30, %31, %32 : vector<2x128xi1>, vector<2x128xf32>
    %34 = arith.mulf %28, %33 : vector<2x128xf32>
    %35 = arith.truncf %34 : vector<2x128xf32> to vector<2x128xbf16>
    %c0_19 = arith.constant 0 : index
    %c0_20 = arith.constant 0 : index
    %36 = vector.load %arg6[%c0_19, %c0_20] : memref<128x128xbf16, #tpu.memory_space<vmem>>, vector<128x128xbf16>
    %cst_21 = arith.constant dense<0.000000e+00> : vector<2x128xf32>
    %37 = tpu.matmul %35, %36, %cst_21 {dimension_numbers = #tpu.dot_dimension_numbers<[1], [0], [0], [1], [0, 0, 1, 1], [], []>} : vector<2x128xbf16>, vector<128x128xbf16>, vector<2x128xf32> -> vector<2x128xf32>
    %c0_22 = arith.constant 0 : index
    %c0_23 = arith.constant 0 : index
    %38 = vector.load %arg7[%c0_22, %c0_23] : memref<1x128xf32, #tpu.memory_space<vmem>>, vector<1x128xf32>
    %39 = vector.broadcast %38 : vector<1x128xf32> to vector<2x128xf32>
    %40 = arith.addf %37, %39 : vector<2x128xf32>
    %cst_24 = arith.constant 0.000000e+00 : f32
    %41 = vector.broadcast %cst_24 : f32 to vector<2x128xf32>
    %42 = arith.cmpf oge, %40, %41 : vector<2x128xf32>
    %cst_25 = arith.constant 1.41421354 : f32
    %cst_26 = arith.constant 0.282842726 : f32
    %43 = vector.broadcast %cst_25 : f32 to vector<2x128xf32>
    %44 = vector.broadcast %cst_26 : f32 to vector<2x128xf32>
    %45 = arith.select %42, %43, %44 : vector<2x128xi1>, vector<2x128xf32>
    %46 = arith.mulf %40, %45 : vector<2x128xf32>
    %47 = arith.truncf %46 : vector<2x128xf32> to vector<2x128xbf16>
    %c0_27 = arith.constant 0 : index
    %c0_28 = arith.constant 0 : index
    %48 = vector.load %arg8[%c0_27, %c0_28] : memref<128x128xbf16, #tpu.memory_space<vmem>>, vector<128x128xbf16>
    %cst_29 = arith.constant dense<0.000000e+00> : vector<2x128xf32>
    %49 = tpu.matmul %47, %48, %cst_29 {dimension_numbers = #tpu.dot_dimension_numbers<[1], [0], [0], [1], [0, 0, 1, 1], [], []>} : vector<2x128xbf16>, vector<128x128xbf16>, vector<2x128xf32> -> vector<2x128xf32>
    %c0_30 = arith.constant 0 : index
    %c0_31 = arith.constant 0 : index
    %50 = vector.load %arg9[%c0_30, %c0_31] : memref<1x128xf32, #tpu.memory_space<vmem>>, vector<1x128xf32>
    %51 = vector.broadcast %50 : vector<1x128xf32> to vector<2x128xf32>
    %52 = arith.addf %49, %51 : vector<2x128xf32>
    %cst_32 = arith.constant 0.000000e+00 : f32
    %53 = vector.broadcast %cst_32 : f32 to vector<2x128xf32>
    %54 = arith.cmpf oge, %52, %53 : vector<2x128xf32>
    %cst_33 = arith.constant 1.41421354 : f32
    %cst_34 = arith.constant 0.282842726 : f32
    %55 = vector.broadcast %cst_33 : f32 to vector<2x128xf32>
    %56 = vector.broadcast %cst_34 : f32 to vector<2x128xf32>
    %57 = arith.select %54, %55, %56 : vector<2x128xi1>, vector<2x128xf32>
    %58 = arith.mulf %52, %57 : vector<2x128xf32>
    %59 = arith.truncf %58 : vector<2x128xf32> to vector<2x128xbf16>
    %c0_35 = arith.constant 0 : index
    %c0_36 = arith.constant 0 : index
    %60 = vector.load %arg11[%c0_35, %c0_36] : memref<128x128xbf16, #tpu.memory_space<vmem>>, vector<128x128xbf16>
    %cst_37 = arith.constant dense<0.000000e+00> : vector<2x128xf32>
    %61 = tpu.matmul %59, %60, %cst_37 {dimension_numbers = #tpu.dot_dimension_numbers<[1], [0], [0], [1], [0, 0, 1, 1], [], []>} : vector<2x128xbf16>, vector<128x128xbf16>, vector<2x128xf32> -> vector<2x128xf32>
    %c0_38 = arith.constant 0 : index
    %c0_39 = arith.constant 0 : index
    %62 = vector.load %arg12[%c0_38, %c0_39] : memref<1x128xf32, #tpu.memory_space<vmem>>, vector<1x128xf32>
    %63 = vector.broadcast %62 : vector<1x128xf32> to vector<2x128xf32>
    %64 = arith.addf %61, %63 : vector<2x128xf32>
    %c5 = arith.constant 5 : index
    %c0_40 = arith.constant 0 : index
    %65 = vector.load %arg0[%c5, %c0_40] : memref<36x128xf32, #tpu.memory_space<vmem>>, vector<4x128xf32>
    %c23 = arith.constant 23 : index
    %c0_41 = arith.constant 0 : index
    %66 = vector.load %arg0[%c23, %c0_41] : memref<36x128xf32, #tpu.memory_space<vmem>>, vector<4x128xf32>
    %67 = tpu.concatenate %65, %66 in 0 : vector<4x128xf32>, vector<4x128xf32> -> vector<8x128xf32>
    %68 = vector.extract_strided_slice %64 {offsets = [0, 0], sizes = [1, 128], strides = [1, 1]} : vector<2x128xf32> to vector<1x128xf32>
    %69 = vector.shape_cast %68 : vector<1x128xf32> to vector<1x128xf32>
    %70 = vector.broadcast %69 : vector<1x128xf32> to vector<4x128xf32>
    %71 = vector.extract_strided_slice %64 {offsets = [1, 0], sizes = [1, 128], strides = [1, 1]} : vector<2x128xf32> to vector<1x128xf32>
    %72 = vector.shape_cast %71 : vector<1x128xf32> to vector<1x128xf32>
    %73 = vector.broadcast %72 : vector<1x128xf32> to vector<4x128xf32>
    %74 = tpu.concatenate %70, %73 in 0 : vector<4x128xf32>, vector<4x128xf32> -> vector<8x128xf32>
    %c0_42 = arith.constant 0 : index
    %c0_43 = arith.constant 0 : index
    %75 = vector.load %arg0[%c0_42, %c0_43] : memref<36x128xf32, #tpu.memory_space<vmem>>, vector<36x128xf32>
    %c0_44 = arith.constant 0 : index
    %c0_45 = arith.constant 0 : index
    %76 = vector.load %arg19[%c0_44, %c0_45] : memref<36x128xf32, #tpu.memory_space<vmem>>, vector<36x128xf32>
    tpu.vector_store %arg19[%c0_44, %c0_45], %75 {strides = array<i32>} : memref<36x128xf32, #tpu.memory_space<vmem>>, vector<36x128xf32>,
    %77 = arith.truncf %67 : vector<8x128xf32> to vector<8x128xbf16>
    %c0_46 = arith.constant 0 : index
    %c0_47 = arith.constant 0 : index
    %78 = vector.load %arg10[%c0_46, %c0_47] : memref<128x128xbf16, #tpu.memory_space<vmem>>, vector<128x128xbf16>
    %cst_48 = arith.constant dense<0.000000e+00> : vector<8x128xf32>
    %79 = tpu.matmul %77, %78, %cst_48 {dimension_numbers = #tpu.dot_dimension_numbers<[1], [0], [0], [1], [0, 0, 1, 1], [], []>} : vector<8x128xbf16>, vector<128x128xbf16>, vector<8x128xf32> -> vector<8x128xf32>
    %80 = arith.addf %79, %74 : vector<8x128xf32>
    %cst_49 = arith.constant 0.000000e+00 : f32
    %81 = vector.broadcast %cst_49 : f32 to vector<8x128xf32>
    %82 = arith.cmpf oge, %80, %81 : vector<8x128xf32>
    %cst_50 = arith.constant 1.41421354 : f32
    %cst_51 = arith.constant 0.282842726 : f32
    %83 = vector.broadcast %cst_50 : f32 to vector<8x128xf32>
    %84 = vector.broadcast %cst_51 : f32 to vector<8x128xf32>
    %85 = arith.select %82, %83, %84 : vector<8x128xi1>, vector<8x128xf32>
    %86 = arith.mulf %80, %85 : vector<8x128xf32>
    %87 = arith.truncf %86 : vector<8x128xf32> to vector<8x128xbf16>
    %c0_52 = arith.constant 0 : index
    %c0_53 = arith.constant 0 : index
    %88 = vector.load %arg13[%c0_52, %c0_53] : memref<128x128xbf16, #tpu.memory_space<vmem>>, vector<128x128xbf16>
    %cst_54 = arith.constant dense<0.000000e+00> : vector<8x128xf32>
    %89 = tpu.matmul %87, %88, %cst_54 {dimension_numbers = #tpu.dot_dimension_numbers<[1], [0], [0], [1], [0, 0, 1, 1], [], []>} : vector<8x128xbf16>, vector<128x128xbf16>, vector<8x128xf32> -> vector<8x128xf32>
    %c0_55 = arith.constant 0 : index
    %c0_56 = arith.constant 0 : index
    %90 = vector.load %arg14[%c0_55, %c0_56] : memref<1x128xf32, #tpu.memory_space<vmem>>, vector<1x128xf32>
    %91 = vector.broadcast %90 : vector<1x128xf32> to vector<8x128xf32>
    %92 = arith.addf %89, %91 : vector<8x128xf32>
    %cst_57 = arith.constant 0.000000e+00 : f32
    %93 = vector.broadcast %cst_57 : f32 to vector<8x128xf32>
    %94 = arith.cmpf oge, %92, %93 : vector<8x128xf32>
    %cst_58 = arith.constant 1.41421354 : f32
    %cst_59 = arith.constant 0.282842726 : f32
    %95 = vector.broadcast %cst_58 : f32 to vector<8x128xf32>
    %96 = vector.broadcast %cst_59 : f32 to vector<8x128xf32>
    %97 = arith.select %94, %95, %96 : vector<8x128xi1>, vector<8x128xf32>
    %98 = arith.mulf %92, %97 : vector<8x128xf32>
    %99 = arith.truncf %98 : vector<8x128xf32> to vector<8x128xbf16>
    %c0_60 = arith.constant 0 : index
    %c0_61 = arith.constant 0 : index
    %100 = vector.load %arg15[%c0_60, %c0_61] : memref<128x128xbf16, #tpu.memory_space<vmem>>, vector<128x128xbf16>
    %cst_62 = arith.constant dense<0.000000e+00> : vector<8x128xf32>
    %101 = tpu.matmul %99, %100, %cst_62 {dimension_numbers = #tpu.dot_dimension_numbers<[1], [0], [0], [1], [0, 0, 1, 1], [], []>} : vector<8x128xbf16>, vector<128x128xbf16>, vector<8x128xf32> -> vector<8x128xf32>
    %c0_63 = arith.constant 0 : index
    %c0_64 = arith.constant 0 : index
    %102 = vector.load %arg16[%c0_63, %c0_64] : memref<1x128xf32, #tpu.memory_space<vmem>>, vector<1x128xf32>
    %103 = vector.broadcast %102 : vector<1x128xf32> to vector<8x128xf32>
    %104 = arith.addf %101, %103 : vector<8x128xf32>
    %cst_65 = arith.constant 0.000000e+00 : f32
    %105 = vector.broadcast %cst_65 : f32 to vector<8x128xf32>
    %106 = arith.cmpf oge, %104, %105 : vector<8x128xf32>
    %cst_66 = arith.constant 1.41421354 : f32
    %cst_67 = arith.constant 0.282842726 : f32
    %107 = vector.broadcast %cst_66 : f32 to vector<8x128xf32>
    %108 = vector.broadcast %cst_67 : f32 to vector<8x128xf32>
    %109 = arith.select %106, %107, %108 : vector<8x128xi1>, vector<8x128xf32>
    %110 = arith.mulf %104, %109 : vector<8x128xf32>
    %111 = arith.truncf %110 : vector<8x128xf32> to vector<8x128xbf16>
    %c0_68 = arith.constant 0 : index
    %c0_69 = arith.constant 0 : index
    %112 = vector.load %arg17[%c0_68, %c0_69] : memref<128x128xbf16, #tpu.memory_space<vmem>>, vector<128x128xbf16>
    %cst_70 = arith.constant dense<0.000000e+00> : vector<8x128xf32>
    %113 = tpu.matmul %111, %112, %cst_70 {dimension_numbers = #tpu.dot_dimension_numbers<[1], [0], [0], [1], [0, 0, 1, 1], [], []>} : vector<8x128xbf16>, vector<128x128xbf16>, vector<8x128xf32> -> vector<8x128xf32>
    %c0_71 = arith.constant 0 : index
    %c0_72 = arith.constant 0 : index
    %114 = vector.load %arg18[%c0_71, %c0_72] : memref<1x128xf32, #tpu.memory_space<vmem>>, vector<1x128xf32>
    %115 = vector.broadcast %114 : vector<1x128xf32> to vector<8x128xf32>
    %116 = arith.addf %113, %115 : vector<8x128xf32>
    %cst_73 = arith.constant 0.000000e+00 : f32
    %117 = vector.broadcast %cst_73 : f32 to vector<8x128xf32>
    %118 = arith.cmpf oge, %116, %117 : vector<8x128xf32>
    %cst_74 = arith.constant 1.41421354 : f32
    %cst_75 = arith.constant 0.282842726 : f32
    %119 = vector.broadcast %cst_74 : f32 to vector<8x128xf32>
    %120 = vector.broadcast %cst_75 : f32 to vector<8x128xf32>
    %121 = arith.select %118, %119, %120 : vector<8x128xi1>, vector<8x128xf32>
    %122 = arith.mulf %116, %121 : vector<8x128xf32>
    %cst_76 = arith.constant 1.000000e-01 : f32
    %123 = vector.broadcast %cst_76 : f32 to vector<8x128xf32>
    %124 = arith.mulf %123, %122 : vector<8x128xf32>
    %125 = arith.addf %67, %124 : vector<8x128xf32>
    %126 = vector.extract_strided_slice %125 {offsets = [0, 0], sizes = [4, 128], strides = [1, 1]} : vector<8x128xf32> to vector<4x128xf32>
    %c5_77 = arith.constant 5 : index
    %c0_78 = arith.constant 0 : index
    %127 = vector.load %arg19[%c5_77, %c0_78] : memref<36x128xf32, #tpu.memory_space<vmem>>, vector<4x128xf32>
    tpu.vector_store %arg19[%c5_77, %c0_78], %126 {strides = array<i32>} : memref<36x128xf32, #tpu.memory_space<vmem>>, vector<4x128xf32>,
    %128 = vector.extract_strided_slice %125 {offsets = [4, 0], sizes = [4, 128], strides = [1, 1]} : vector<8x128xf32> to vector<4x128xf32>
    %c23_79 = arith.constant 23 : index
    %c0_80 = arith.constant 0 : index
    %129 = vector.load %arg19[%c23_79, %c0_80] : memref<36x128xf32, #tpu.memory_space<vmem>>, vector<4x128xf32>
    tpu.vector_store %arg19[%c23_79, %c0_80], %128 {strides = array<i32>} : memref<36x128xf32, #tpu.memory_space<vmem>>, vector<4x128xf32>,
    return
  }
}

</mosaic_0001>

<llo_original>
// kernel: latent_mapper_forward.1
$region0: #{latent_mapper_forward.1}
  #allocation0 [shape = 'u32[]', space=smem, size = 0x4, offset = 0x4, fixed_abs, tag = 'smem constant byte address 0x4 - core index']
  #allocation1 [shape = 'u32[144,128]{1,0:T(1,128)}', space=vmem, size = 0x12000, scoped, tag = 'internal scratch']
  %s0 = inlined_call_operand.vmem [shape: f32[36,128], index: 0, kind: input, shape index: {}]
  %s1 = inlined_call_operand.vmem [shape: f32[2,128], index: 1, kind: input, shape index: {}]
  %s2 = inlined_call_operand.vmem [shape: bf16[128,128], index: 2, kind: input, shape index: {}]
  %s3 = inlined_call_operand.hbm [shape: f32[1,128], index: 3, kind: input, shape index: {}]
  %s4 = inlined_call_operand.vmem [shape: bf16[128,128], index: 4, kind: input, shape index: {}]
  %s5 = inlined_call_operand.hbm [shape: f32[1,128], index: 5, kind: input, shape index: {}]
  %s6 = inlined_call_operand.hbm [shape: bf16[128,128], index: 6, kind: input, shape index: {}]
  %s7 = inlined_call_operand.hbm [shape: f32[1,128], index: 7, kind: input, shape index: {}]
  %s8 = inlined_call_operand.vmem [shape: bf16[128,128], index: 8, kind: input, shape index: {}]
  %s9 = inlined_call_operand.vmem [shape: f32[1,128], index: 9, kind: input, shape index: {}]
  %s10 = inlined_call_operand.hbm [shape: bf16[128,128], index: 10, kind: input, shape index: {}]
  %s11 = inlined_call_operand.hbm [shape: bf16[128,128], index: 11, kind: input, shape index: {}]
  %s12 = inlined_call_operand.vmem [shape: f32[1,128], index: 12, kind: input, shape index: {}]
  %s13 = inlined_call_operand.hbm [shape: bf16[128,128], index: 13, kind: input, shape index: {}]
  %s14 = inlined_call_operand.vmem [shape: f32[1,128], index: 14, kind: input, shape index: {}]
  %s15 = inlined_call_operand.hbm [shape: bf16[128,128], index: 15, kind: input, shape index: {}]
  %s16 = inlined_call_operand.vmem [shape: f32[1,128], index: 16, kind: input, shape index: {}]
  %s17 = inlined_call_operand.hbm [shape: bf16[128,128], index: 17, kind: input, shape index: {}]
  %s18 = inlined_call_operand.vmem [shape: f32[1,128], index: 18, kind: input, shape index: {}]
  %s19 = inlined_call_operand.vmem [shape: f32[36,128], index: 19, kind: output, shape index: {}]
  %s20 = sld [smem:[#allocation0]]
  $region122: #{latent_mapper_forward.1} parent=0
    _
  %s22 = ssub.s32 1, %s20
  %s23 = scalar_select 0, %s22, %s20
  $region1: #{latent_mapper_forward.1} parent=0
    #allocation2 [shape = 'u8[512]{0}', space=vmem, size = 0x400, scoped, tag = 'input window, operand 3, single buffered']
    #allocation3 [shape = 's32[1]{0}', space=sflag, size = 0x4, scoped, tag = 'scoped memory for latent_mapper_forward.1']
    #allocation4 [shape = 'u8[512]{0}', space=vmem, size = 0x400, scoped, tag = 'input window, operand 5, single buffered']
    #allocation5 [shape = 's32[1]{0}', space=sflag, size = 0x4, scoped, tag = 'scoped memory for latent_mapper_forward.1']
    #allocation6 [shape = 'u8[32768]{0}', space=vmem, size = 0x8000, scoped, tag = 'input window, operand 6, single buffered']
    #allocation7 [shape = 'u8[512]{0}', space=vmem, size = 0x400, scoped, tag = 'input window, operand 7, single buffered']
    #allocation8 [shape = 's32[1]{0}', space=sflag, size = 0x4, scoped, tag = 'scoped memory for latent_mapper_forward.1']
    #allocation9 [shape = 'u8[32768]{0}', space=vmem, size = 0x8000, scoped, tag = 'input window, operand 10, single buffered']
    #allocation10 [shape = 'u8[32768]{0}', space=vmem, size = 0x8000, scoped, tag = 'input window, operand 11, single buffered']
    #allocation11 [shape = 's32[1]{0}', space=sflag, size = 0x4, scoped, tag = 'scoped memory for latent_mapper_forward.1']
    #allocation12 [shape = 'u8[32768]{0}', space=vmem, size = 0x8000, scoped, tag = 'input window, operand 13, single buffered']
    #allocation13 [shape = 'u8[32768]{0}', space=vmem, size = 0x8000, scoped, tag = 'input window, operand 15, single buffered']
    #allocation14 [shape = 's32[1]{0}', space=sflag, size = 0x4, scoped, tag = 'scoped memory for latent_mapper_forward.1']
    #allocation15 [shape = 'u8[32768]{0}', space=vmem, size = 0x8000, scoped, tag = 'input window, operand 17, single buffered']
    %24 = vsyncpa [#allocation3], 0
    %25 = vsyncpa [#allocation5], 0
    %26 = vsyncpa [#allocation8], 0
    %27 = vsyncpa [#allocation11], 0
    %28 = vsyncpa [#allocation14], 0
    // Predicated region
    $region2: #{latent_mapper_forward.1} parent=1 // pred_check
      _
    $region3: #{latent_mapper_forward.1} parent=1 // pred_check_branch
      %30 = sbr.rel (0) target = $region5
    $region4: #{latent_mapper_forward.1} parent=1 // pred_region
      _
    $region5: #{latent_mapper_forward.1} parent=1 // pred_fallthru
      _
    // Predicated region
    $region6: #{latent_mapper_forward.1} parent=1 // pred_check
      _
    $region7: #{latent_mapper_forward.1} parent=1 // pred_check_branch
      %32 = sbr.rel (0) target = $region9
    $region8: #{latent_mapper_forward.1} parent=1 // pred_region
      _
    $region9: #{latent_mapper_forward.1} parent=1 // pred_fallthru
      _
    // Predicated region
    $region10: #{latent_mapper_forward.1} parent=1 // pred_check
      _
    $region11: #{latent_mapper_forward.1} parent=1 // pred_check_branch
      %34 = sbr.rel (0) target = $region13
    $region12: #{latent_mapper_forward.1} parent=1 // pred_region
      _
    $region13: #{latent_mapper_forward.1} parent=1 // pred_fallthru
      _
    // Predicated region
    $region14: #{latent_mapper_forward.1} parent=1 // pred_check
      _
    $region15: #{latent_mapper_forward.1} parent=1 // pred_check_branch
      %36 = sbr.rel (0) target = $region17
    $region16: #{latent_mapper_forward.1} parent=1 // pred_region
      %s38 = ssub.s32 16, 16
      %39 = vsyncadd [#allocation3], %s38
      %s41 = sshll.u32 [#allocation2], 4
      %s42 = int_to_ptr.vmem [resolvable:$true] %s41
      %44 = dma.hbm_to_vmem [thread:$0]  %s3, 16, %s42, [#allocation3]
    $region17: #{latent_mapper_forward.1} parent=1 // pred_fallthru
      _
    // Predicated region
    $region18: #{latent_mapper_forward.1} parent=1 // pred_check
      _
    $region19: #{latent_mapper_forward.1} parent=1 // pred_check_branch
      %46 = sbr.rel (0) target = $region21
    $region20: #{latent_mapper_forward.1} parent=1 // pred_region
      _
    $region21: #{latent_mapper_forward.1} parent=1 // pred_fallthru
      _
    // Predicated region
    $region22: #{latent_mapper_forward.1} parent=1 // pred_check
      _
    $region23: #{latent_mapper_forward.1} parent=1 // pred_check_branch
      %48 = sbr.rel (0) target = $region25
    $region24: #{latent_mapper_forward.1} parent=1 // pred_region
      %s50 = ssub.s32 16, 16
      %51 = vsyncadd [#allocation5], %s50
      %s53 = sshll.u32 [#allocation4], 4
      %s54 = int_to_ptr.vmem [resolvable:$true] %s53
      %56 = dma.hbm_to_vmem [thread:$0]  %s5, 16, %s54, [#allocation5]
    $region25: #{latent_mapper_forward.1} parent=1 // pred_fallthru
      _
    // Predicated region
    $region26: #{latent_mapper_forward.1} parent=1 // pred_check
      _
    $region27: #{latent_mapper_forward.1} parent=1 // pred_check_branch
      %58 = sbr.rel (0) target = $region29
    $region28: #{latent_mapper_forward.1} parent=1 // pred_region
      %s60 = ssub.s32 1024, 1024
      %61 = vsyncadd [#allocation5], %s60
      %s62 = sshll.u32 [#allocation6], 4
      %s63 = int_to_ptr.vmem [resolvable:$true] %s62
      %68 = dma.hbm_to_vmem [thread:$0]  %s6, 1024, %s63, [#allocation5], 64, 64, 4
    $region29: #{latent_mapper_forward.1} parent=1 // pred_fallthru
      _
    // Predicated region
    $region30: #{latent_mapper_forward.1} parent=1 // pred_check
      _
    $region31: #{latent_mapper_forward.1} parent=1 // pred_check_branch
      %70 = sbr.rel (0) target = $region33
    $region32: #{latent_mapper_forward.1} parent=1 // pred_region
      %s72 = ssub.s32 16, 16
      %73 = vsyncadd [#allocation8], %s72
      %s75 = sshll.u32 [#allocation7], 4
      %s76 = int_to_ptr.vmem [resolvable:$true] %s75
      %78 = dma.hbm_to_vmem [thread:$0]  %s7, 16, %s76, [#allocation8]
    $region33: #{latent_mapper_forward.1} parent=1 // pred_fallthru
      _
    // Predicated region
    $region34: #{latent_mapper_forward.1} parent=1 // pred_check
      _
    $region35: #{latent_mapper_forward.1} parent=1 // pred_check_branch
      %80 = sbr.rel (0) target = $region37
    $region36: #{latent_mapper_forward.1} parent=1 // pred_region
      _
    $region37: #{latent_mapper_forward.1} parent=1 // pred_fallthru
      _
    // Predicated region
    $region38: #{latent_mapper_forward.1} parent=1 // pred_check
      _
    $region39: #{latent_mapper_forward.1} parent=1 // pred_check_branch
      %82 = sbr.rel (0) target = $region41
    $region40: #{latent_mapper_forward.1} parent=1 // pred_region
      _
    $region41: #{latent_mapper_forward.1} parent=1 // pred_fallthru
      _
    // Predicated region
    $region42: #{latent_mapper_forward.1} parent=1 // pred_check
      _
    $region43: #{latent_mapper_forward.1} parent=1 // pred_check_branch
      %84 = sbr.rel (0) target = $region45
    $region44: #{latent_mapper_forward.1} parent=1 // pred_region
      %s86 = ssub.s32 1024, 1024
      %87 = vsyncadd [#allocation8], %s86
      %s88 = sshll.u32 [#allocation9], 4
      %s89 = int_to_ptr.vmem [resolvable:$true] %s88
      %94 = dma.hbm_to_vmem [thread:$0]  %s10, 1024, %s89, [#allocation8], 64, 64, 4
    $region45: #{latent_mapper_forward.1} parent=1 // pred_fallthru
      _
    // Predicated region
    $region46: #{latent_mapper_forward.1} parent=1 // pred_check
      _
    $region47: #{latent_mapper_forward.1} parent=1 // pred_check_branch
      %96 = sbr.rel (0) target = $region49
    $region48: #{latent_mapper_forward.1} parent=1 // pred_region
      %s98 = ssub.s32 1024, 1024
      %99 = vsyncadd [#allocation11], %s98
      %s100 = sshll.u32 [#allocation10], 4
      %s101 = int_to_ptr.vmem [resolvable:$true] %s100
      %106 = dma.hbm_to_vmem [thread:$0]  %s11, 1024, %s101, [#allocation11], 64, 64, 4
    $region49: #{latent_mapper_forward.1} parent=1 // pred_fallthru
      _
    // Predicated region
    $region50: #{latent_mapper_forward.1} parent=1 // pred_check
      _
    $region51: #{latent_mapper_forward.1} parent=1 // pred_check_branch
      %108 = sbr.rel (0) target = $region53
    $region52: #{latent_mapper_forward.1} parent=1 // pred_region
      _
    $region53: #{latent_mapper_forward.1} parent=1 // pred_fallthru
      _
    // Predicated region
    $region54: #{latent_mapper_forward.1} parent=1 // pred_check
      _
    $region55: #{latent_mapper_forward.1} parent=1 // pred_check_branch
      %110 = sbr.rel (0) target = $region57
    $region56: #{latent_mapper_forward.1} parent=1 // pred_region
      %s112 = ssub.s32 1024, 1024
      %113 = vsyncadd [#allocation11], %s112
      %s114 = sshll.u32 [#allocation12], 4
      %s115 = int_to_ptr.vmem [resolvable:$true] %s114
      %120 = dma.hbm_to_vmem [thread:$0]  %s13, 1024, %s115, [#allocation11], 64, 64, 4
    $region57: #{latent_mapper_forward.1} parent=1 // pred_fallthru
      _
    // Predicated region
    $region58: #{latent_mapper_forward.1} parent=1 // pred_check
      _
    $region59: #{latent_mapper_forward.1} parent=1 // pred_check_branch
      %122 = sbr.rel (0) target = $region61
    $region60: #{latent_mapper_forward.1} parent=1 // pred_region
      _
    $region61: #{latent_mapper_forward.1} parent=1 // pred_fallthru
      _
    // Predicated region
    $region62: #{latent_mapper_forward.1} parent=1 // pred_check
      _
    $region63: #{latent_mapper_forward.1} parent=1 // pred_check_branch
      %124 = sbr.rel (0) target = $region65
    $region64: #{latent_mapper_forward.1} parent=1 // pred_region
      %s126 = ssub.s32 1024, 1024
      %127 = vsyncadd [#allocation14], %s126
      %s128 = sshll.u32 [#allocation13], 4
      %s129 = int_to_ptr.vmem [resolvable:$true] %s128
      %134 = dma.hbm_to_vmem [thread:$0]  %s15, 1024, %s129, [#allocation14], 64, 64, 4
    $region65: #{latent_mapper_forward.1} parent=1 // pred_fallthru
      _
    // Predicated region
    $region66: #{latent_mapper_forward.1} parent=1 // pred_check
      _
    $region67: #{latent_mapper_forward.1} parent=1 // pred_check_branch
      %136 = sbr.rel (0) target = $region69
    $region68: #{latent_mapper_forward.1} parent=1 // pred_region
      _
    $region69: #{latent_mapper_forward.1} parent=1 // pred_fallthru
      _
    // Predicated region
    $region70: #{latent_mapper_forward.1} parent=1 // pred_check
      _
    $region71: #{latent_mapper_forward.1} parent=1 // pred_check_branch
      %138 = sbr.rel (0) target = $region73
    $region72: #{latent_mapper_forward.1} parent=1 // pred_region
      %s140 = ssub.s32 1024, 1024
      %141 = vsyncadd [#allocation14], %s140
      %s142 = sshll.u32 [#allocation15], 4
      %s143 = int_to_ptr.vmem [resolvable:$true] %s142
      %148 = dma.hbm_to_vmem [thread:$0]  %s17, 1024, %s143, [#allocation14], 64, 64, 4
    $region73: #{latent_mapper_forward.1} parent=1 // pred_fallthru
      _
    // Predicated region
    $region74: #{latent_mapper_forward.1} parent=1 // pred_check
      _
    $region75: #{latent_mapper_forward.1} parent=1 // pred_check_branch
      %150 = sbr.rel (0) target = $region77
    $region76: #{latent_mapper_forward.1} parent=1 // pred_region
      _
    $region77: #{latent_mapper_forward.1} parent=1 // pred_fallthru
      _
    // Predicated region
    $region78: #{latent_mapper_forward.1} parent=1 // pred_check
      _
    $region79: #{latent_mapper_forward.1} parent=1 // pred_check_branch
      %152 = sbr.rel (0) target = $region81
    $region80: #{latent_mapper_forward.1} parent=1 // pred_region
      %153 = dma.done [#allocation3], 16
    $region81: #{latent_mapper_forward.1} parent=1 // pred_fallthru
      _
    // Predicated region
    $region82: #{latent_mapper_forward.1} parent=1 // pred_check
      _
    $region83: #{latent_mapper_forward.1} parent=1 // pred_check_branch
      %155 = sbr.rel (0) target = $region85
    $region84: #{latent_mapper_forward.1} parent=1 // pred_region
      %156 = dma.done [#allocation5], 16
    $region85: #{latent_mapper_forward.1} parent=1 // pred_fallthru
      _
    // Predicated region
    $region86: #{latent_mapper_forward.1} parent=1 // pred_check
      _
    $region87: #{latent_mapper_forward.1} parent=1 // pred_check_branch
      %158 = sbr.rel (0) target = $region89
    $region88: #{latent_mapper_forward.1} parent=1 // pred_region
      %159 = dma.done [#allocation5], 1024
    $region89: #{latent_mapper_forward.1} parent=1 // pred_fallthru
      _
    // Predicated region
    $region90: #{latent_mapper_forward.1} parent=1 // pred_check
      _
    $region91: #{latent_mapper_forward.1} parent=1 // pred_check_branch
      %161 = sbr.rel (0) target = $region93
    $region92: #{latent_mapper_forward.1} parent=1 // pred_region
      %162 = dma.done [#allocation8], 16
    $region93: #{latent_mapper_forward.1} parent=1 // pred_fallthru
      _
    // Predicated region
    $region94: #{latent_mapper_forward.1} parent=1 // pred_check
      _
    $region95: #{latent_mapper_forward.1} parent=1 // pred_check_branch
      %164 = sbr.rel (0) target = $region97
    $region96: #{latent_mapper_forward.1} parent=1 // pred_region
      %165 = dma.done [#allocation8], 1024
    $region97: #{latent_mapper_forward.1} parent=1 // pred_fallthru
      _
    // Predicated region
    $region98: #{latent_mapper_forward.1} parent=1 // pred_check
      _
    $region99: #{latent_mapper_forward.1} parent=1 // pred_check_branch
      %167 = sbr.rel (0) target = $region101
    $region100: #{latent_mapper_forward.1} parent=1 // pred_region
      %168 = dma.done [#allocation11], 1024
    $region101: #{latent_mapper_forward.1} parent=1 // pred_fallthru
      _
    // Predicated region
    $region102: #{latent_mapper_forward.1} parent=1 // pred_check
      _
    $region103: #{latent_mapper_forward.1} parent=1 // pred_check_branch
      %170 = sbr.rel (0) target = $region105
    $region104: #{latent_mapper_forward.1} parent=1 // pred_region
      %171 = dma.done [#allocation11], 1024
    $region105: #{latent_mapper_forward.1} parent=1 // pred_fallthru
      _
    // Predicated region
    $region106: #{latent_mapper_forward.1} parent=1 // pred_check
      _
    $region107: #{latent_mapper_forward.1} parent=1 // pred_check_branch
      %173 = sbr.rel (0) target = $region109
    $region108: #{latent_mapper_forward.1} parent=1 // pred_region
      %174 = dma.done [#allocation14], 1024
    $region109: #{latent_mapper_forward.1} parent=1 // pred_fallthru
      _
    // Predicated region
    $region110: #{latent_mapper_forward.1} parent=1 // pred_check
      _
    $region111: #{latent_mapper_forward.1} parent=1 // pred_check_branch
      %176 = sbr.rel (0) target = $region113
    $region112: #{latent_mapper_forward.1} parent=1 // pred_region
      %177 = dma.done [#allocation14], 1024
    $region113: #{latent_mapper_forward.1} parent=1 // pred_fallthru
      _
    %v179 = vld [vmem:[%s1] sm:$0x3]
    %v180 = vmul.f32 %v179, %v179
    %vm181 = vcmask 1041408
    %v182 = vsel %vm181, %v180, 0.0
    %183 = vadd.xlane.f32.xlu0 %v182
    %v184 = vpop.xlane.xlu0 %183
    %v185 = vrcp.pop 128.0
    %v186 = vmul.f32 %v184, %v185
    %v187 = vadd.f32 %v186, 1e-08
    %v188 = vrsqrt.pop %v187
    %v189 = vmul.f32 %v179, %v188
    %v190 = vpack.c.bf16 %v189, %v189
    %v191 = vld [vmem:[%s2] sm:$0xf]
    %v192 = vld [vmem:[%s2 + $0x4] sm:$0xf]
    %v193 = vld [vmem:[%s2 + $0x8] sm:$0xf]
    %v194 = vld [vmem:[%s2 + $0xc] sm:$0xf]
    %v195 = vld [vmem:[%s2 + $0x10] sm:$0xf]
    %v196 = vld [vmem:[%s2 + $0x14] sm:$0xf]
    %v197 = vld [vmem:[%s2 + $0x18] sm:$0xf]
    %v198 = vld [vmem:[%s2 + $0x1c] sm:$0xf]
    %v199 = vld [vmem:[%s2 + $0x20] sm:$0xf]
    %v200 = vld [vmem:[%s2 + $0x24] sm:$0xf]
    %v201 = vld [vmem:[%s2 + $0x28] sm:$0xf]
    %v202 = vld [vmem:[%s2 + $0x2c] sm:$0xf]
    %v203 = vld [vmem:[%s2 + $0x30] sm:$0xf]
    %v204 = vld [vmem:[%s2 + $0x34] sm:$0xf]
    %v205 = vld [vmem:[%s2 + $0x38] sm:$0xf]
    %v206 = vld [vmem:[%s2 + $0x3c] sm:$0xf]
    %v207 = vld [vmem:[#allocation2] sm:$0x1]
    %v209 = vlaneseq
    %v210 = vshrl.u32 %v209, 7
    %v211 = vsub.s32 0, %v210
    %v212 = vrot.slane %v207, %v211
    %v230 = vunpack.c.l.b16 %v191
    %v231 = vunpack.c.l.b16 %v192
    %v232 = vunpack.c.l.b16 %v193
    %v233 = vunpack.c.l.b16 %v194
    %v234 = vunpack.c.l.b16 %v195
    %v235 = vunpack.c.l.b16 %v196
    %v236 = vunpack.c.l.b16 %v197
    %v237 = vunpack.c.l.b16 %v198
    %v238 = vunpack.c.l.b16 %v199
    %v239 = vunpack.c.l.b16 %v200
    %v240 = vunpack.c.l.b16 %v201
    %v241 = vunpack.c.l.b16 %v202
    %v242 = vunpack.c.l.b16 %v203
    %v243 = vunpack.c.l.b16 %v204
    %v244 = vunpack.c.l.b16 %v205
    %v245 = vunpack.c.l.b16 %v206
    %v246 = vpack.c.b16 %v231, %v230
    %v247 = vpack.c.b16 %v233, %v232
    %v248 = vpack.c.b16 %v235, %v234
    %v249 = vpack.c.b16 %v237, %v236
    %v250 = vpack.c.b16 %v239, %v238
    %v251 = vpack.c.b16 %v241, %v240
    %v252 = vpack.c.b16 %v243, %v242
    %v253 = vpack.c.b16 %v245, %v244
    %262 = vmatprep.subr.bf16.mxu0 0
    %263 = vmatpush1.bf16.msra.mxu0 %v246
    %264 = vmatprep.subr.bf16.mxu0 0
    %265 = vmatpush1.bf16.msra.mxu0 %v247
    %266 = vmatprep.subr.bf16.mxu0 0
    %267 = vmatpush1.bf16.msra.mxu0 %v248
    %268 = vmatprep.subr.bf16.mxu0 0
    %269 = vmatpush1.bf16.msra.mxu0 %v249
    %270 = vmatprep.subr.bf16.mxu0 0
    %271 = vmatpush1.bf16.msra.mxu0 %v250
    %272 = vmatprep.subr.bf16.mxu0 0
    %273 = vmatpush1.bf16.msra.mxu0 %v251
    %274 = vmatprep.subr.bf16.mxu0 0
    %275 = vmatpush1.bf16.msra.mxu0 %v252
    %276 = vmatprep.subr.bf16.mxu0 0
    %277 = vmatpush1.bf16.msra.mxu0 %v253
    %278 = vmatprep.subr.bf16.mxu0 0
    %279 = vmatpush1.bf16.msra.mxu0 0
    %280 = vmatprep.subr.bf16.mxu0 0
    %281 = vmatpush1.bf16.msra.mxu0 0
    %282 = vmatprep.subr.bf16.mxu0 0
    %283 = vmatpush1.bf16.msra.mxu0 0
    %284 = vmatprep.subr.bf16.mxu0 0
    %285 = vmatpush1.bf16.msra.mxu0 0
    %286 = vmatprep.subr.bf16.mxu0 0
    %287 = vmatpush1.bf16.msra.mxu0 0
    %288 = vmatprep.subr.bf16.mxu0 0
    %289 = vmatpush1.bf16.msra.mxu0 0
    %290 = vmatprep.subr.bf16.mxu0 0
    %291 = vmatpush1.bf16.msra.mxu0 0
    %292 = vmatprep.subr.bf16.mxu0 0
    %293 = vmatpush1.bf16.msra.mxu0 0
    %294 = vmatprep.mubr.bf16.mxu0 0
    %295 = vmatmul.mubr.bf16.gmra.mrb[0].mxu0 %v190
    %v296 = vpop.f32.mrb[0].mxu0
    %v297 = vadd.f32 %v212, %v296
    %v298 = vpop.f32.mrb[0].mxu0
    %v299 = vpop.f32.mrb[0].mxu0
    %v300 = vpop.f32.mrb[0].mxu0
    %301 = vdwg.mxu0
    %vm302 = vcmp.ge.f32.partialorder %v297, 0.0
    %v303 = vsel %vm302, 1.4142135, 0.28284273
    %v304 = vmul.f32 %v297, %v303
    %v305 = vpack.c.bf16 %v304, %v304
    %v306 = vld [vmem:[%s4] sm:$0xf]
    %v307 = vld [vmem:[%s4 + $0x4] sm:$0xf]
    %v308 = vld [vmem:[%s4 + $0x8] sm:$0xf]
    %v309 = vld [vmem:[%s4 + $0xc] sm:$0xf]
    %v310 = vld [vmem:[%s4 + $0x10] sm:$0xf]
    %v311 = vld [vmem:[%s4 + $0x14] sm:$0xf]
    %v312 = vld [vmem:[%s4 + $0x18] sm:$0xf]
    %v313 = vld [vmem:[%s4 + $0x1c] sm:$0xf]
    %v314 = vld [vmem:[%s4 + $0x20] sm:$0xf]
    %v315 = vld [vmem:[%s4 + $0x24] sm:$0xf]
    %v316 = vld [vmem:[%s4 + $0x28] sm:$0xf]
    %v317 = vld [vmem:[%s4 + $0x2c] sm:$0xf]
    %v318 = vld [vmem:[%s4 + $0x30] sm:$0xf]
    %v319 = vld [vmem:[%s4 + $0x34] sm:$0xf]
    %v320 = vld [vmem:[%s4 + $0x38] sm:$0xf]
    %v321 = vld [vmem:[%s4 + $0x3c] sm:$0xf]
    %v322 = vld [vmem:[#allocation4] sm:$0x1]
    %v324 = vlaneseq
    %v325 = vshrl.u32 %v324, 7
    %v326 = vsub.s32 0, %v325
    %v327 = vrot.slane %v322, %v326
    %v345 = vunpack.c.l.b16 %v306
    %v346 = vunpack.c.l.b16 %v307
    %v347 = vunpack.c.l.b16 %v308
    %v348 = vunpack.c.l.b16 %v309
    %v349 = vunpack.c.l.b16 %v310
    %v350 = vunpack.c.l.b16 %v311
    %v351 = vunpack.c.l.b16 %v312
    %v352 = vunpack.c.l.b16 %v313
    %v353 = vunpack.c.l.b16 %v314
    %v354 = vunpack.c.l.b16 %v315
    %v355 = vunpack.c.l.b16 %v316
    %v356 = vunpack.c.l.b16 %v317
    %v357 = vunpack.c.l.b16 %v318
    %v358 = vunpack.c.l.b16 %v319
    %v359 = vunpack.c.l.b16 %v320
    %v360 = vunpack.c.l.b16 %v321
    %v361 = vpack.c.b16 %v346, %v345
    %v362 = vpack.c.b16 %v348, %v347
    %v363 = vpack.c.b16 %v350, %v349
    %v364 = vpack.c.b16 %v352, %v351
    %v365 = vpack.c.b16 %v354, %v353
    %v366 = vpack.c.b16 %v356, %v355
    %v367 = vpack.c.b16 %v358, %v357
    %v368 = vpack.c.b16 %v360, %v359
    %377 = vmatprep.subr.bf16.mxu0 0
    %378 = vmatpush1.bf16.msra.mxu0 %v361
    %379 = vmatprep.subr.bf16.mxu0 0
    %380 = vmatpush1.bf16.msra.mxu0 %v362
    %381 = vmatprep.subr.bf16.mxu0 0
    %382 = vmatpush1.bf16.msra.mxu0 %v363
    %383 = vmatprep.subr.bf16.mxu0 0
    %384 = vmatpush1.bf16.msra.mxu0 %v364
    %385 = vmatprep.subr.bf16.mxu0 0
    %386 = vmatpush1.bf16.msra.mxu0 %v365
    %387 = vmatprep.subr.bf16.mxu0 0
    %388 = vmatpush1.bf16.msra.mxu0 %v366
    %389 = vmatprep.subr.bf16.mxu0 0
    %390 = vmatpush1.bf16.msra.mxu0 %v367
    %391 = vmatprep.subr.bf16.mxu0 0
    %392 = vmatpush1.bf16.msra.mxu0 %v368
    %393 = vmatprep.subr.bf16.mxu0 0
    %394 = vmatpush1.bf16.msra.mxu0 0
    %395 = vmatprep.subr.bf16.mxu0 0
    %396 = vmatpush1.bf16.msra.mxu0 0
    %397 = vmatprep.subr.bf16.mxu0 0
    %398 = vmatpush1.bf16.msra.mxu0 0
    %399 = vmatprep.subr.bf16.mxu0 0
    %400 = vmatpush1.bf16.msra.mxu0 0
    %401 = vmatprep.subr.bf16.mxu0 0
    %402 = vmatpush1.bf16.msra.mxu0 0
    %403 = vmatprep.subr.bf16.mxu0 0
    %404 = vmatpush1.bf16.msra.mxu0 0
    %405 = vmatprep.subr.bf16.mxu0 0
    %406 = vmatpush1.bf16.msra.mxu0 0
    %407 = vmatprep.subr.bf16.mxu0 0
    %408 = vmatpush1.bf16.msra.mxu0 0
    %409 = vmatprep.mubr.bf16.mxu0 0
    %410 = vmatmul.mubr.bf16.gmra.mrb[0].mxu0 %v305
    %v411 = vpop.f32.mrb[0].mxu0
    %v412 = vadd.f32 %v327, %v411
    %v413 = vpop.f32.mrb[0].mxu0
    %v414 = vpop.f32.mrb[0].mxu0
    %v415 = vpop.f32.mrb[0].mxu0
    %416 = vdwg.mxu0
    %vm417 = vcmp.ge.f32.partialorder %v412, 0.0
    %v418 = vsel %vm417, 1.4142135, 0.28284273
    %v419 = vmul.f32 %v412, %v418
    %v420 = vpack.c.bf16 %v419, %v419
    %v421 = vld [vmem:[#allocation6] sm:$0xf]
    %v422 = vld [vmem:[#allocation6 + $0x4] sm:$0xf]
    %v423 = vld [vmem:[#allocation6 + $0x8] sm:$0xf]
    %v424 = vld [vmem:[#allocation6 + $0xc] sm:$0xf]
    %v425 = vld [vmem:[#allocation6 + $0x10] sm:$0xf]
    %v426 = vld [vmem:[#allocation6 + $0x14] sm:$0xf]
    %v427 = vld [vmem:[#allocation6 + $0x18] sm:$0xf]
    %v428 = vld [vmem:[#allocation6 + $0x1c] sm:$0xf]
    %v429 = vld [vmem:[#allocation6 + $0x20] sm:$0xf]
    %v430 = vld [vmem:[#allocation6 + $0x24] sm:$0xf]
    %v431 = vld [vmem:[#allocation6 + $0x28] sm:$0xf]
    %v432 = vld [vmem:[#allocation6 + $0x2c] sm:$0xf]
    %v433 = vld [vmem:[#allocation6 + $0x30] sm:$0xf]
    %v434 = vld [vmem:[#allocation6 + $0x34] sm:$0xf]
    %v435 = vld [vmem:[#allocation6 + $0x38] sm:$0xf]
    %v436 = vld [vmem:[#allocation6 + $0x3c] sm:$0xf]
    %v437 = vld [vmem:[#allocation7] sm:$0x1]
    %v439 = vlaneseq
    %v440 = vshrl.u32 %v439, 7
    %v441 = vsub.s32 0, %v440
    %v442 = vrot.slane %v437, %v441
    %v460 = vunpack.c.l.b16 %v421
    %v461 = vunpack.c.l.b16 %v422
    %v462 = vunpack.c.l.b16 %v423
    %v463 = vunpack.c.l.b16 %v424
    %v464 = vunpack.c.l.b16 %v425
    %v465 = vunpack.c.l.b16 %v426
    %v466 = vunpack.c.l.b16 %v427
    %v467 = vunpack.c.l.b16 %v428
    %v468 = vunpack.c.l.b16 %v429
    %v469 = vunpack.c.l.b16 %v430
    %v470 = vunpack.c.l.b16 %v431
    %v471 = vunpack.c.l.b16 %v432
    %v472 = vunpack.c.l.b16 %v433
    %v473 = vunpack.c.l.b16 %v434
    %v474 = vunpack.c.l.b16 %v435
    %v475 = vunpack.c.l.b16 %v436
    %v476 = vpack.c.b16 %v461, %v460
    %v477 = vpack.c.b16 %v463, %v462
    %v478 = vpack.c.b16 %v465, %v464
    %v479 = vpack.c.b16 %v467, %v466
    %v480 = vpack.c.b16 %v469, %v468
    %v481 = vpack.c.b16 %v471, %v470
    %v482 = vpack.c.b16 %v473, %v472
    %v483 = vpack.c.b16 %v475, %v474
    %492 = vmatprep.subr.bf16.mxu0 0
    %493 = vmatpush1.bf16.msra.mxu0 %v476
    %494 = vmatprep.subr.bf16.mxu0 0
    %495 = vmatpush1.bf16.msra.mxu0 %v477
    %496 = vmatprep.subr.bf16.mxu0 0
    %497 = vmatpush1.bf16.msra.mxu0 %v478
    %498 = vmatprep.subr.bf16.mxu0 0
    %499 = vmatpush1.bf16.msra.mxu0 %v479
    %500 = vmatprep.subr.bf16.mxu0 0
    %501 = vmatpush1.bf16.msra.mxu0 %v480
    %502 = vmatprep.subr.bf16.mxu0 0
    %503 = vmatpush1.bf16.msra.mxu0 %v481
    %504 = vmatprep.subr.bf16.mxu0 0
    %505 = vmatpush1.bf16.msra.mxu0 %v482
    %506 = vmatprep.subr.bf16.mxu0 0
    %507 = vmatpush1.bf16.msra.mxu0 %v483
    %508 = vmatprep.subr.bf16.mxu0 0
    %509 = vmatpush1.bf16.msra.mxu0 0
    %510 = vmatprep.subr.bf16.mxu0 0
    %511 = vmatpush1.bf16.msra.mxu0 0
    %512 = vmatprep.subr.bf16.mxu0 0
    %513 = vmatpush1.bf16.msra.mxu0 0
    %514 = vmatprep.subr.bf16.mxu0 0
    %515 = vmatpush1.bf16.msra.mxu0 0
    %516 = vmatprep.subr.bf16.mxu0 0
    %517 = vmatpush1.bf16.msra.mxu0 0
    %518 = vmatprep.subr.bf16.mxu0 0
    %519 = vmatpush1.bf16.msra.mxu0 0
    %520 = vmatprep.subr.bf16.mxu0 0
    %521 = vmatpush1.bf16.msra.mxu0 0
    %522 = vmatprep.subr.bf16.mxu0 0
    %523 = vmatpush1.bf16.msra.mxu0 0
    %524 = vmatprep.mubr.bf16.mxu0 0
    %525 = vmatmul.mubr.bf16.gmra.mrb[0].mxu0 %v420
    %v526 = vpop.f32.mrb[0].mxu0
    %v527 = vadd.f32 %v442, %v526
    %v528 = vpop.f32.mrb[0].mxu0
    %v529 = vpop.f32.mrb[0].mxu0
    %v530 = vpop.f32.mrb[0].mxu0
    %531 = vdwg.mxu0
    %vm532 = vcmp.ge.f32.partialorder %v527, 0.0
    %v533 = vsel %vm532, 1.4142135, 0.28284273
    %v534 = vmul.f32 %v527, %v533
    %v535 = vpack.c.bf16 %v534, %v534
    %v536 = vld [vmem:[%s8] sm:$0xf]
    %v537 = vld [vmem:[%s8 + $0x4] sm:$0xf]
    %v538 = vld [vmem:[%s8 + $0x8] sm:$0xf]
    %v539 = vld [vmem:[%s8 + $0xc] sm:$0xf]
    %v540 = vld [vmem:[%s8 + $0x10] sm:$0xf]
    %v541 = vld [vmem:[%s8 + $0x14] sm:$0xf]
    %v542 = vld [vmem:[%s8 + $0x18] sm:$0xf]
    %v543 = vld [vmem:[%s8 + $0x1c] sm:$0xf]
    %v544 = vld [vmem:[%s8 + $0x20] sm:$0xf]
    %v545 = vld [vmem:[%s8 + $0x24] sm:$0xf]
    %v546 = vld [vmem:[%s8 + $0x28] sm:$0xf]
    %v547 = vld [vmem:[%s8 + $0x2c] sm:$0xf]
    %v548 = vld [vmem:[%s8 + $0x30] sm:$0xf]
    %v549 = vld [vmem:[%s8 + $0x34] sm:$0xf]
    %v550 = vld [vmem:[%s8 + $0x38] sm:$0xf]
    %v551 = vld [vmem:[%s8 + $0x3c] sm:$0xf]
    %v552 = vld [vmem:[%s9] sm:$0x1]
    %v554 = vlaneseq
    %v555 = vshrl.u32 %v554, 7
    %v556 = vsub.s32 0, %v555
    %v557 = vrot.slane %v552, %v556
    %v575 = vunpack.c.l.b16 %v536
    %v576 = vunpack.c.l.b16 %v537
    %v577 = vunpack.c.l.b16 %v538
    %v578 = vunpack.c.l.b16 %v539
    %v579 = vunpack.c.l.b16 %v540
    %v580 = vunpack.c.l.b16 %v541
    %v581 = vunpack.c.l.b16 %v542
    %v582 = vunpack.c.l.b16 %v543
    %v583 = vunpack.c.l.b16 %v544
    %v584 = vunpack.c.l.b16 %v545
    %v585 = vunpack.c.l.b16 %v546
    %v586 = vunpack.c.l.b16 %v547
    %v587 = vunpack.c.l.b16 %v548
    %v588 = vunpack.c.l.b16 %v549
    %v589 = vunpack.c.l.b16 %v550
    %v590 = vunpack.c.l.b16 %v551
    %v591 = vpack.c.b16 %v576, %v575
    %v592 = vpack.c.b16 %v578, %v577
    %v593 = vpack.c.b16 %v580, %v579
    %v594 = vpack.c.b16 %v582, %v581
    %v595 = vpack.c.b16 %v584, %v583
    %v596 = vpack.c.b16 %v586, %v585
    %v597 = vpack.c.b16 %v588, %v587
    %v598 = vpack.c.b16 %v590, %v589
    %607 = vmatprep.subr.bf16.mxu0 0
    %608 = vmatpush1.bf16.msra.mxu0 %v591
    %609 = vmatprep.subr.bf16.mxu0 0
    %610 = vmatpush1.bf16.msra.mxu0 %v592
    %611 = vmatprep.subr.bf16.mxu0 0
    %612 = vmatpush1.bf16.msra.mxu0 %v593
    %613 = vmatprep.subr.bf16.mxu0 0
    %614 = vmatpush1.bf16.msra.mxu0 %v594
    %615 = vmatprep.subr.bf16.mxu0 0
    %616 = vmatpush1.bf16.msra.mxu0 %v595
    %617 = vmatprep.subr.bf16.mxu0 0
    %618 = vmatpush1.bf16.msra.mxu0 %v596
    %619 = vmatprep.subr.bf16.mxu0 0
    %620 = vmatpush1.bf16.msra.mxu0 %v597
    %621 = vmatprep.subr.bf16.mxu0 0
    %622 = vmatpush1.bf16.msra.mxu0 %v598
    %623 = vmatprep.subr.bf16.mxu0 0
    %624 = vmatpush1.bf16.msra.mxu0 0
    %625 = vmatprep.subr.bf16.mxu0 0
    %626 = vmatpush1.bf16.msra.mxu0 0
    %627 = vmatprep.subr.bf16.mxu0 0
    %628 = vmatpush1.bf16.msra.mxu0 0
    %629 = vmatprep.subr.bf16.mxu0 0
    %630 = vmatpush1.bf16.msra.mxu0 0
    %631 = vmatprep.subr.bf16.mxu0 0
    %632 = vmatpush1.bf16.msra.mxu0 0
    %633 = vmatprep.subr.bf16.mxu0 0
    %634 = vmatpush1.bf16.msra.mxu0 0
    %635 = vmatprep.subr.bf16.mxu0 0
    %636 = vmatpush1.bf16.msra.mxu0 0
    %637 = vmatprep.subr.bf16.mxu0 0
    %638 = vmatpush1.bf16.msra.mxu0 0
    %639 = vmatprep.mubr.bf16.mxu0 0
    %640 = vmatmul.mubr.bf16.gmra.mrb[0].mxu0 %v535
    %v641 = vpop.f32.mrb[0].mxu0
    %v642 = vadd.f32 %v557, %v641
    %v643 = vpop.f32.mrb[0].mxu0
    %v644 = vpop.f32.mrb[0].mxu0
    %v645 = vpop.f32.mrb[0].mxu0
    %646 = vdwg.mxu0
    %vm647 = vcmp.ge.f32.partialorder %v642, 0.0
    %v648 = vsel %vm647, 1.4142135, 0.28284273
    %v649 = vmul.f32 %v642, %v648
    %v650 = vpack.c.bf16 %v649, %v649
    %v651 = vld [vmem:[#allocation10] sm:$0xf]
    %v652 = vld [vmem:[#allocation10 + $0x4] sm:$0xf]
    %v653 = vld [vmem:[#allocation10 + $0x8] sm:$0xf]
    %v654 = vld [vmem:[#allocation10 + $0xc] sm:$0xf]
    %v655 = vld [vmem:[#allocation10 + $0x10] sm:$0xf]
    %v656 = vld [vmem:[#allocation10 + $0x14] sm:$0xf]
    %v657 = vld [vmem:[#allocation10 + $0x18] sm:$0xf]
    %v658 = vld [vmem:[#allocation10 + $0x1c] sm:$0xf]
    %v659 = vld [vmem:[#allocation10 + $0x20] sm:$0xf]
    %v660 = vld [vmem:[#allocation10 + $0x24] sm:$0xf]
    %v661 = vld [vmem:[#allocation10 + $0x28] sm:$0xf]
    %v662 = vld [vmem:[#allocation10 + $0x2c] sm:$0xf]
    %v663 = vld [vmem:[#allocation10 + $0x30] sm:$0xf]
    %v664 = vld [vmem:[#allocation10 + $0x34] sm:$0xf]
    %v665 = vld [vmem:[#allocation10 + $0x38] sm:$0xf]
    %v666 = vld [vmem:[#allocation10 + $0x3c] sm:$0xf]
    %v667 = vld [vmem:[%s12] sm:$0x1]
    %v669 = vlaneseq
    %v670 = vshrl.u32 %v669, 7
    %v671 = vsub.s32 0, %v670
    %v672 = vrot.slane %v667, %v671
    %v690 = vunpack.c.l.b16 %v651
    %v691 = vunpack.c.l.b16 %v652
    %v692 = vunpack.c.l.b16 %v653
    %v693 = vunpack.c.l.b16 %v654
    %v694 = vunpack.c.l.b16 %v655
    %v695 = vunpack.c.l.b16 %v656
    %v696 = vunpack.c.l.b16 %v657
    %v697 = vunpack.c.l.b16 %v658
    %v698 = vunpack.c.l.b16 %v659
    %v699 = vunpack.c.l.b16 %v660
    %v700 = vunpack.c.l.b16 %v661
    %v701 = vunpack.c.l.b16 %v662
    %v702 = vunpack.c.l.b16 %v663
    %v703 = vunpack.c.l.b16 %v664
    %v704 = vunpack.c.l.b16 %v665
    %v705 = vunpack.c.l.b16 %v666
    %v706 = vpack.c.b16 %v691, %v690
    %v707 = vpack.c.b16 %v693, %v692
    %v708 = vpack.c.b16 %v695, %v694
    %v709 = vpack.c.b16 %v697, %v696
    %v710 = vpack.c.b16 %v699, %v698
    %v711 = vpack.c.b16 %v701, %v700
    %v712 = vpack.c.b16 %v703, %v702
    %v713 = vpack.c.b16 %v705, %v704
    %722 = vmatprep.subr.bf16.mxu0 0
    %723 = vmatpush1.bf16.msra.mxu0 %v706
    %724 = vmatprep.subr.bf16.mxu0 0
    %725 = vmatpush1.bf16.msra.mxu0 %v707
    %726 = vmatprep.subr.bf16.mxu0 0
    %727 = vmatpush1.bf16.msra.mxu0 %v708
    %728 = vmatprep.subr.bf16.mxu0 0
    %729 = vmatpush1.bf16.msra.mxu0 %v709
    %730 = vmatprep.subr.bf16.mxu0 0
    %731 = vmatpush1.bf16.msra.mxu0 %v710
    %732 = vmatprep.subr.bf16.mxu0 0
    %733 = vmatpush1.bf16.msra.mxu0 %v711
    %734 = vmatprep.subr.bf16.mxu0 0
    %735 = vmatpush1.bf16.msra.mxu0 %v712
    %736 = vmatprep.subr.bf16.mxu0 0
    %737 = vmatpush1.bf16.msra.mxu0 %v713
    %738 = vmatprep.subr.bf16.mxu0 0
    %739 = vmatpush1.bf16.msra.mxu0 0
    %740 = vmatprep.subr.bf16.mxu0 0
    %741 = vmatpush1.bf16.msra.mxu0 0
    %742 = vmatprep.subr.bf16.mxu0 0
    %743 = vmatpush1.bf16.msra.mxu0 0
    %744 = vmatprep.subr.bf16.mxu0 0
    %745 = vmatpush1.bf16.msra.mxu0 0
    %746 = vmatprep.subr.bf16.mxu0 0
    %747 = vmatpush1.bf16.msra.mxu0 0
    %748 = vmatprep.subr.bf16.mxu0 0
    %749 = vmatpush1.bf16.msra.mxu0 0
    %750 = vmatprep.subr.bf16.mxu0 0
    %751 = vmatpush1.bf16.msra.mxu0 0
    %752 = vmatprep.subr.bf16.mxu0 0
    %753 = vmatpush1.bf16.msra.mxu0 0
    %754 = vmatprep.mubr.bf16.mxu0 0
    %755 = vmatmul.mubr.bf16.gmra.mrb[0].mxu0 %v650
    %v756 = vpop.f32.mrb[0].mxu0
    %v757 = vadd.f32 %v672, %v756
    %v758 = vpop.f32.mrb[0].mxu0
    %v759 = vpop.f32.mrb[0].mxu0
    %v760 = vpop.f32.mrb[0].mxu0
    %761 = vdwg.mxu0
    %v762 = vld [vmem:[%s0 + $0x5] sm:$0xf]
    %v763 = vld [vmem:[%s0 + $0x17] sm:$0xf]
    %v765 = vrot.slane %v763, 4
    %vm767 = vcmask 1043456
    %v768 = vsel %vm767, %v762, %v765
    %v769 = vlaneseq
    %v770 = vshrl.u32 %v769, 7
    %v771 = vsub.s32 0, %v770
    %v772 = vrot.slane %v757, %v771
    %v773 = vlaneseq
    %v774 = vshrl.u32 %v773, 7
    %v775 = vsub.s32 1, %v774
    %v776 = vrot.slane %v757, %v775
    %v777 = vsel %vm767, %v772, %v776
    %v778 = vld [vmem:[%s0] sm:$0xff]
    %v779 = vld [vmem:[%s0 + $0x8] sm:$0xff]
    %v780 = vld [vmem:[%s0 + $0x10] sm:$0xff]
    %v781 = vld [vmem:[%s0 + $0x18] sm:$0xff]
    %v782 = vld [vmem:[%s0 + $0x20] sm:$0xf]
    %783 = vst [vmem:[%s19] sm:$0xff] %v778
    %784 = vst [vmem:[%s19 + $0x8] sm:$0xff] %v779
    %785 = vst [vmem:[%s19 + $0x10] sm:$0xff] %v780
    %786 = vst [vmem:[%s19 + $0x18] sm:$0xff] %v781
    %787 = vst [vmem:[%s19 + $0x20] sm:$0xf] %v782
    %v788 = vpack.c.bf16 %v768, %v768
    %v789 = vld [vmem:[#allocation9] sm:$0xf]
    %v790 = vld [vmem:[#allocation9 + $0x4] sm:$0xf]
    %v791 = vld [vmem:[#allocation9 + $0x8] sm:$0xf]
    %v792 = vld [vmem:[#allocation9 + $0xc] sm:$0xf]
    %v793 = vld [vmem:[#allocation9 + $0x10] sm:$0xf]
    %v794 = vld [vmem:[#allocation9 + $0x14] sm:$0xf]
    %v795 = vld [vmem:[#allocation9 + $0x18] sm:$0xf]
    %v796 = vld [vmem:[#allocation9 + $0x1c] sm:$0xf]
    %v797 = vld [vmem:[#allocation9 + $0x20] sm:$0xf]
    %v798 = vld [vmem:[#allocation9 + $0x24] sm:$0xf]
    %v799 = vld [vmem:[#allocation9 + $0x28] sm:$0xf]
    %v800 = vld [vmem:[#allocation9 + $0x2c] sm:$0xf]
    %v801 = vld [vmem:[#allocation9 + $0x30] sm:$0xf]
    %v802 = vld [vmem:[#allocation9 + $0x34] sm:$0xf]
    %v803 = vld [vmem:[#allocation9 + $0x38] sm:$0xf]
    %v804 = vld [vmem:[#allocation9 + $0x3c] sm:$0xf]
    %v821 = vunpack.c.l.b16 %v789
    %v822 = vunpack.c.l.b16 %v790
    %v823 = vunpack.c.l.b16 %v791
    %v824 = vunpack.c.l.b16 %v792
    %v825 = vunpack.c.l.b16 %v793
    %v826 = vunpack.c.l.b16 %v794
    %v827 = vunpack.c.l.b16 %v795
    %v828 = vunpack.c.l.b16 %v796
    %v829 = vunpack.c.l.b16 %v797
    %v830 = vunpack.c.l.b16 %v798
    %v831 = vunpack.c.l.b16 %v799
    %v832 = vunpack.c.l.b16 %v800
    %v833 = vunpack.c.l.b16 %v801
    %v834 = vunpack.c.l.b16 %v802
    %v835 = vunpack.c.l.b16 %v803
    %v836 = vunpack.c.l.b16 %v804
    %v837 = vpack.c.b16 %v822, %v821
    %v838 = vpack.c.b16 %v824, %v823
    %v839 = vpack.c.b16 %v826, %v825
    %v840 = vpack.c.b16 %v828, %v827
    %v841 = vpack.c.b16 %v830, %v829
    %v842 = vpack.c.b16 %v832, %v831
    %v843 = vpack.c.b16 %v834, %v833
    %v844 = vpack.c.b16 %v836, %v835
    %853 = vmatprep.subr.bf16.mxu0 0
    %854 = vmatpush1.bf16.msra.mxu0 %v837
    %855 = vmatprep.subr.bf16.mxu0 0
    %856 = vmatpush1.bf16.msra.mxu0 %v838
    %857 = vmatprep.subr.bf16.mxu0 0
    %858 = vmatpush1.bf16.msra.mxu0 %v839
    %859 = vmatprep.subr.bf16.mxu0 0
    %860 = vmatpush1.bf16.msra.mxu0 %v840
    %861 = vmatprep.subr.bf16.mxu0 0
    %862 = vmatpush1.bf16.msra.mxu0 %v841
    %863 = vmatprep.subr.bf16.mxu0 0
    %864 = vmatpush1.bf16.msra.mxu0 %v842
    %865 = vmatprep.subr.bf16.mxu0 0
    %866 = vmatpush1.bf16.msra.mxu0 %v843
    %867 = vmatprep.subr.bf16.mxu0 0
    %868 = vmatpush1.bf16.msra.mxu0 %v844
    %869 = vmatprep.subr.bf16.mxu0 0
    %870 = vmatpush1.bf16.msra.mxu0 0
    %871 = vmatprep.subr.bf16.mxu0 0
    %872 = vmatpush1.bf16.msra.mxu0 0
    %873 = vmatprep.subr.bf16.mxu0 0
    %874 = vmatpush1.bf16.msra.mxu0 0
    %875 = vmatprep.subr.bf16.mxu0 0
    %876 = vmatpush1.bf16.msra.mxu0 0
    %877 = vmatprep.subr.bf16.mxu0 0
    %878 = vmatpush1.bf16.msra.mxu0 0
    %879 = vmatprep.subr.bf16.mxu0 0
    %880 = vmatpush1.bf16.msra.mxu0 0
    %881 = vmatprep.subr.bf16.mxu0 0
    %882 = vmatpush1.bf16.msra.mxu0 0
    %883 = vmatprep.subr.bf16.mxu0 0
    %884 = vmatpush1.bf16.msra.mxu0 0
    %885 = vmatprep.mubr.bf16.mxu0 0
    %886 = vmatmul.mubr.bf16.gmra.mrb[0].mxu0 %v788
    %v887 = vpop.f32.mrb[0].mxu0
    %v888 = vadd.f32 %v777, %v887
    %v889 = vpop.f32.mrb[0].mxu0
    %v890 = vpop.f32.mrb[0].mxu0
    %v891 = vpop.f32.mrb[0].mxu0
    %892 = vdwg.mxu0
    %vm893 = vcmp.ge.f32.partialorder %v888, 0.0
    %v894 = vsel %vm893, 1.4142135, 0.28284273
    %v895 = vmul.f32 %v888, %v894
    %v896 = vpack.c.bf16 %v895, %v895
    %v897 = vld [vmem:[#allocation12] sm:$0xf]
    %v898 = vld [vmem:[#allocation12 + $0x4] sm:$0xf]
    %v899 = vld [vmem:[#allocation12 + $0x8] sm:$0xf]
    %v900 = vld [vmem:[#allocation12 + $0xc] sm:$0xf]
    %v901 = vld [vmem:[#allocation12 + $0x10] sm:$0xf]
    %v902 = vld [vmem:[#allocation12 + $0x14] sm:$0xf]
    %v903 = vld [vmem:[#allocation12 + $0x18] sm:$0xf]
    %v904 = vld [vmem:[#allocation12 + $0x1c] sm:$0xf]
    %v905 = vld [vmem:[#allocation12 + $0x20] sm:$0xf]
    %v906 = vld [vmem:[#allocation12 + $0x24] sm:$0xf]
    %v907 = vld [vmem:[#allocation12 + $0x28] sm:$0xf]
    %v908 = vld [vmem:[#allocation12 + $0x2c] sm:$0xf]
    %v909 = vld [vmem:[#allocation12 + $0x30] sm:$0xf]
    %v910 = vld [vmem:[#allocation12 + $0x34] sm:$0xf]
    %v911 = vld [vmem:[#allocation12 + $0x38] sm:$0xf]
    %v912 = vld [vmem:[#allocation12 + $0x3c] sm:$0xf]
    %v913 = vld [vmem:[%s14] sm:$0x1]
    %v915 = vlaneseq
    %v916 = vshrl.u32 %v915, 7
    %v917 = vsub.s32 0, %v916
    %v918 = vrot.slane %v913, %v917
    %v936 = vunpack.c.l.b16 %v897
    %v937 = vunpack.c.l.b16 %v898
    %v938 = vunpack.c.l.b16 %v899
    %v939 = vunpack.c.l.b16 %v900
    %v940 = vunpack.c.l.b16 %v901
    %v941 = vunpack.c.l.b16 %v902
    %v942 = vunpack.c.l.b16 %v903
    %v943 = vunpack.c.l.b16 %v904
    %v944 = vunpack.c.l.b16 %v905
    %v945 = vunpack.c.l.b16 %v906
    %v946 = vunpack.c.l.b16 %v907
    %v947 = vunpack.c.l.b16 %v908
    %v948 = vunpack.c.l.b16 %v909
    %v949 = vunpack.c.l.b16 %v910
    %v950 = vunpack.c.l.b16 %v911
    %v951 = vunpack.c.l.b16 %v912
    %v952 = vpack.c.b16 %v937, %v936
    %v953 = vpack.c.b16 %v939, %v938
    %v954 = vpack.c.b16 %v941, %v940
    %v955 = vpack.c.b16 %v943, %v942
    %v956 = vpack.c.b16 %v945, %v944
    %v957 = vpack.c.b16 %v947, %v946
    %v958 = vpack.c.b16 %v949, %v948
    %v959 = vpack.c.b16 %v951, %v950
    %968 = vmatprep.subr.bf16.mxu0 0
    %969 = vmatpush1.bf16.msra.mxu0 %v952
    %970 = vmatprep.subr.bf16.mxu0 0
    %971 = vmatpush1.bf16.msra.mxu0 %v953
    %972 = vmatprep.subr.bf16.mxu0 0
    %973 = vmatpush1.bf16.msra.mxu0 %v954
    %974 = vmatprep.subr.bf16.mxu0 0
    %975 = vmatpush1.bf16.msra.mxu0 %v955
    %976 = vmatprep.subr.bf16.mxu0 0
    %977 = vmatpush1.bf16.msra.mxu0 %v956
    %978 = vmatprep.subr.bf16.mxu0 0
    %979 = vmatpush1.bf16.msra.mxu0 %v957
    %980 = vmatprep.subr.bf16.mxu0 0
    %981 = vmatpush1.bf16.msra.mxu0 %v958
    %982 = vmatprep.subr.bf16.mxu0 0
    %983 = vmatpush1.bf16.msra.mxu0 %v959
    %984 = vmatprep.subr.bf16.mxu0 0
    %985 = vmatpush1.bf16.msra.mxu0 0
    %986 = vmatprep.subr.bf16.mxu0 0
    %987 = vmatpush1.bf16.msra.mxu0 0
    %988 = vmatprep.subr.bf16.mxu0 0
    %989 = vmatpush1.bf16.msra.mxu0 0
    %990 = vmatprep.subr.bf16.mxu0 0
    %991 = vmatpush1.bf16.msra.mxu0 0
    %992 = vmatprep.subr.bf16.mxu0 0
    %993 = vmatpush1.bf16.msra.mxu0 0
    %994 = vmatprep.subr.bf16.mxu0 0
    %995 = vmatpush1.bf16.msra.mxu0 0
    %996 = vmatprep.subr.bf16.mxu0 0
    %997 = vmatpush1.bf16.msra.mxu0 0
    %998 = vmatprep.subr.bf16.mxu0 0
    %999 = vmatpush1.bf16.msra.mxu0 0
    %1000 = vmatprep.mubr.bf16.mxu0 0
    %1001 = vmatmul.mubr.bf16.gmra.mrb[0].mxu0 %v896
    %v1002 = vpop.f32.mrb[0].mxu0
    %v1003 = vadd.f32 %v918, %v1002
    %v1004 = vpop.f32.mrb[0].mxu0
    %v1005 = vpop.f32.mrb[0].mxu0
    %v1006 = vpop.f32.mrb[0].mxu0
    %1007 = vdwg.mxu0
    %vm1008 = vcmp.ge.f32.partialorder %v1003, 0.0
    %v1009 = vsel %vm1008, 1.4142135, 0.28284273
    %v1010 = vmul.f32 %v1003, %v1009
    %v1011 = vpack.c.bf16 %v1010, %v1010
    %v1012 = vld [vmem:[#allocation13] sm:$0xf]
    %v1013 = vld [vmem:[#allocation13 + $0x4] sm:$0xf]
    %v1014 = vld [vmem:[#allocation13 + $0x8] sm:$0xf]
    %v1015 = vld [vmem:[#allocation13 + $0xc] sm:$0xf]
    %v1016 = vld [vmem:[#allocation13 + $0x10] sm:$0xf]
    %v1017 = vld [vmem:[#allocation13 + $0x14] sm:$0xf]
    %v1018 = vld [vmem:[#allocation13 + $0x18] sm:$0xf]
    %v1019 = vld [vmem:[#allocation13 + $0x1c] sm:$0xf]
    %v1020 = vld [vmem:[#allocation13 + $0x20] sm:$0xf]
    %v1021 = vld [vmem:[#allocation13 + $0x24] sm:$0xf]
    %v1022 = vld [vmem:[#allocation13 + $0x28] sm:$0xf]
    %v1023 = vld [vmem:[#allocation13 + $0x2c] sm:$0xf]
    %v1024 = vld [vmem:[#allocation13 + $0x30] sm:$0xf]
    %v1025 = vld [vmem:[#allocation13 + $0x34] sm:$0xf]
    %v1026 = vld [vmem:[#allocation13 + $0x38] sm:$0xf]
    %v1027 = vld [vmem:[#allocation13 + $0x3c] sm:$0xf]
    %v1028 = vld [vmem:[%s16] sm:$0x1]
    %v1030 = vlaneseq
    %v1031 = vshrl.u32 %v1030, 7
    %v1032 = vsub.s32 0, %v1031
    %v1033 = vrot.slane %v1028, %v1032
    %v1051 = vunpack.c.l.b16 %v1012
    %v1052 = vunpack.c.l.b16 %v1013
    %v1053 = vunpack.c.l.b16 %v1014
    %v1054 = vunpack.c.l.b16 %v1015
    %v1055 = vunpack.c.l.b16 %v1016
    %v1056 = vunpack.c.l.b16 %v1017
    %v1057 = vunpack.c.l.b16 %v1018
    %v1058 = vunpack.c.l.b16 %v1019
    %v1059 = vunpack.c.l.b16 %v1020
    %v1060 = vunpack.c.l.b16 %v1021
    %v1061 = vunpack.c.l.b16 %v1022
    %v1062 = vunpack.c.l.b16 %v1023
    %v1063 = vunpack.c.l.b16 %v1024
    %v1064 = vunpack.c.l.b16 %v1025
    %v1065 = vunpack.c.l.b16 %v1026
    %v1066 = vunpack.c.l.b16 %v1027
    %v1067 = vpack.c.b16 %v1052, %v1051
    %v1068 = vpack.c.b16 %v1054, %v1053
    %v1069 = vpack.c.b16 %v1056, %v1055
    %v1070 = vpack.c.b16 %v1058, %v1057
    %v1071 = vpack.c.b16 %v1060, %v1059
    %v1072 = vpack.c.b16 %v1062, %v1061
    %v1073 = vpack.c.b16 %v1064, %v1063
    %v1074 = vpack.c.b16 %v1066, %v1065
    %1083 = vmatprep.subr.bf16.mxu0 0
    %1084 = vmatpush1.bf16.msra.mxu0 %v1067
    %1085 = vmatprep.subr.bf16.mxu0 0
    %1086 = vmatpush1.bf16.msra.mxu0 %v1068
    %1087 = vmatprep.subr.bf16.mxu0 0
    %1088 = vmatpush1.bf16.msra.mxu0 %v1069
    %1089 = vmatprep.subr.bf16.mxu0 0
    %1090 = vmatpush1.bf16.msra.mxu0 %v1070
    %1091 = vmatprep.subr.bf16.mxu0 0
    %1092 = vmatpush1.bf16.msra.mxu0 %v1071
    %1093 = vmatprep.subr.bf16.mxu0 0
    %1094 = vmatpush1.bf16.msra.mxu0 %v1072
    %1095 = vmatprep.subr.bf16.mxu0 0
    %1096 = vmatpush1.bf16.msra.mxu0 %v1073
    %1097 = vmatprep.subr.bf16.mxu0 0
    %1098 = vmatpush1.bf16.msra.mxu0 %v1074
    %1099 = vmatprep.subr.bf16.mxu0 0
    %1100 = vmatpush1.bf16.msra.mxu0 0
    %1101 = vmatprep.subr.bf16.mxu0 0
    %1102 = vmatpush1.bf16.msra.mxu0 0
    %1103 = vmatprep.subr.bf16.mxu0 0
    %1104 = vmatpush1.bf16.msra.mxu0 0
    %1105 = vmatprep.subr.bf16.mxu0 0
    %1106 = vmatpush1.bf16.msra.mxu0 0
    %1107 = vmatprep.subr.bf16.mxu0 0
    %1108 = vmatpush1.bf16.msra.mxu0 0
    %1109 = vmatprep.subr.bf16.mxu0 0
    %1110 = vmatpush1.bf16.msra.mxu0 0
    %1111 = vmatprep.subr.bf16.mxu0 0
    %1112 = vmatpush1.bf16.msra.mxu0 0
    %1113 = vmatprep.subr.bf16.mxu0 0
    %1114 = vmatpush1.bf16.msra.mxu0 0
    %1115 = vmatprep.mubr.bf16.mxu0 0
    %1116 = vmatmul.mubr.bf16.gmra.mrb[0].mxu0 %v1011
    %v1117 = vpop.f32.mrb[0].mxu0
    %v1118 = vadd.f32 %v1033, %v1117
    %v1119 = vpop.f32.mrb[0].mxu0
    %v1120 = vpop.f32.mrb[0].mxu0
    %v1121 = vpop.f32.mrb[0].mxu0
    %1122 = vdwg.mxu0
    %vm1123 = vcmp.ge.f32.partialorder %v1118, 0.0
    %v1124 = vsel %vm1123, 1.4142135, 0.28284273
    %v1125 = vmul.f32 %v1118, %v1124
    %v1126 = vpack.c.bf16 %v1125, %v1125
    %v1127 = vld [vmem:[#allocation15] sm:$0xf]
    %v1128 = vld [vmem:[#allocation15 + $0x4] sm:$0xf]
    %v1129 = vld [vmem:[#allocation15 + $0x8] sm:$0xf]
    %v1130 = vld [vmem:[#allocation15 + $0xc] sm:$0xf]
    %v1131 = vld [vmem:[#allocation15 + $0x10] sm:$0xf]
    %v1132 = vld [vmem:[#allocation15 + $0x14] sm:$0xf]
    %v1133 = vld [vmem:[#allocation15 + $0x18] sm:$0xf]
    %v1134 = vld [vmem:[#allocation15 + $0x1c] sm:$0xf]
    %v1135 = vld [vmem:[#allocation15 + $0x20] sm:$0xf]
    %v1136 = vld [vmem:[#allocation15 + $0x24] sm:$0xf]
    %v1137 = vld [vmem:[#allocation15 + $0x28] sm:$0xf]
    %v1138 = vld [vmem:[#allocation15 + $0x2c] sm:$0xf]
    %v1139 = vld [vmem:[#allocation15 + $0x30] sm:$0xf]
    %v1140 = vld [vmem:[#allocation15 + $0x34] sm:$0xf]
    %v1141 = vld [vmem:[#allocation15 + $0x38] sm:$0xf]
    %v1142 = vld [vmem:[#allocation15 + $0x3c] sm:$0xf]
    %v1143 = vld [vmem:[%s18] sm:$0x1]
    %v1145 = vlaneseq
    %v1146 = vshrl.u32 %v1145, 7
    %v1147 = vsub.s32 0, %v1146
    %v1148 = vrot.slane %v1143, %v1147
    %v1166 = vunpack.c.l.b16 %v1127
    %v1167 = vunpack.c.l.b16 %v1128
    %v1168 = vunpack.c.l.b16 %v1129
    %v1169 = vunpack.c.l.b16 %v1130
    %v1170 = vunpack.c.l.b16 %v1131
    %v1171 = vunpack.c.l.b16 %v1132
    %v1172 = vunpack.c.l.b16 %v1133
    %v1173 = vunpack.c.l.b16 %v1134
    %v1174 = vunpack.c.l.b16 %v1135
    %v1175 = vunpack.c.l.b16 %v1136
    %v1176 = vunpack.c.l.b16 %v1137
    %v1177 = vunpack.c.l.b16 %v1138
    %v1178 = vunpack.c.l.b16 %v1139
    %v1179 = vunpack.c.l.b16 %v1140
    %v1180 = vunpack.c.l.b16 %v1141
    %v1181 = vunpack.c.l.b16 %v1142
    %v1182 = vpack.c.b16 %v1167, %v1166
    %v1183 = vpack.c.b16 %v1169, %v1168
    %v1184 = vpack.c.b16 %v1171, %v1170
    %v1185 = vpack.c.b16 %v1173, %v1172
    %v1186 = vpack.c.b16 %v1175, %v1174
    %v1187 = vpack.c.b16 %v1177, %v1176
    %v1188 = vpack.c.b16 %v1179, %v1178
    %v1189 = vpack.c.b16 %v1181, %v1180
    %1198 = vmatprep.subr.bf16.mxu0 0
    %1199 = vmatpush1.bf16.msra.mxu0 %v1182
    %1200 = vmatprep.subr.bf16.mxu0 0
    %1201 = vmatpush1.bf16.msra.mxu0 %v1183
    %1202 = vmatprep.subr.bf16.mxu0 0
    %1203 = vmatpush1.bf16.msra.mxu0 %v1184
    %1204 = vmatprep.subr.bf16.mxu0 0
    %1205 = vmatpush1.bf16.msra.mxu0 %v1185
    %1206 = vmatprep.subr.bf16.mxu0 0
    %1207 = vmatpush1.bf16.msra.mxu0 %v1186
    %1208 = vmatprep.subr.bf16.mxu0 0
    %1209 = vmatpush1.bf16.msra.mxu0 %v1187
    %1210 = vmatprep.subr.bf16.mxu0 0
    %1211 = vmatpush1.bf16.msra.mxu0 %v1188
    %1212 = vmatprep.subr.bf16.mxu0 0
    %1213 = vmatpush1.bf16.msra.mxu0 %v1189
    %1214 = vmatprep.subr.bf16.mxu0 0
    %1215 = vmatpush1.bf16.msra.mxu0 0
    %1216 = vmatprep.subr.bf16.mxu0 0
    %1217 = vmatpush1.bf16.msra.mxu0 0
    %1218 = vmatprep.subr.bf16.mxu0 0
    %1219 = vmatpush1.bf16.msra.mxu0 0
    %1220 = vmatprep.subr.bf16.mxu0 0
    %1221 = vmatpush1.bf16.msra.mxu0 0
    %1222 = vmatprep.subr.bf16.mxu0 0
    %1223 = vmatpush1.bf16.msra.mxu0 0
    %1224 = vmatprep.subr.bf16.mxu0 0
    %1225 = vmatpush1.bf16.msra.mxu0 0
    %1226 = vmatprep.subr.bf16.mxu0 0
    %1227 = vmatpush1.bf16.msra.mxu0 0
    %1228 = vmatprep.subr.bf16.mxu0 0
    %1229 = vmatpush1.bf16.msra.mxu0 0
    %1230 = vmatprep.mubr.bf16.mxu0 0
    %1231 = vmatmul.mubr.bf16.gmra.mrb[0].mxu0 %v1126
    %v1232 = vpop.f32.mrb[0].mxu0
    %v1233 = vadd.f32 %v1148, %v1232
    %v1234 = vpop.f32.mrb[0].mxu0
    %v1235 = vpop.f32.mrb[0].mxu0
    %v1236 = vpop.f32.mrb[0].mxu0
    %1237 = vdwg.mxu0
    %vm1238 = vcmp.ge.f32.partialorder %v1233, 0.0
    %v1239 = vsel %vm1238, 1.4142135, 0.28284273
    %v1240 = vmul.f32 %v1233, %v1239
    %v1241 = vmul.f32 %v1240, 0.1
    %v1242 = vadd.f32 %v768, %v1241
    %1243 = vst [vmem:[%s19 + $0x5] sm:$0xf] %v1242
    %1244 = vst [vmem:[%s19 + $0x13] sm:$0xf0] %v1242
    // Predicated region
    $region114: #{latent_mapper_forward.1} parent=1 // pred_check
      _
    $region115: #{latent_mapper_forward.1} parent=1 // pred_check_branch
      %1246 = sbr.rel (0) target = $region117
    $region116: #{latent_mapper_forward.1} parent=1 // pred_region
      _
    $region117: #{latent_mapper_forward.1} parent=1 // pred_fallthru
      _
    // Predicated region
    $region118: #{latent_mapper_forward.1} parent=1 // pred_check
      _
    $region119: #{latent_mapper_forward.1} parent=1 // pred_check_branch
      %1248 = sbr.rel (0) target = $region121
    $region120: #{latent_mapper_forward.1} parent=1 // pred_region
      _
    $region121: #{latent_mapper_forward.1} parent=1 // pred_fallthru
      _
    %1249 = vsyncpa [#allocation3], 1
    %1250 = vsyncpa [#allocation5], 1
    %1251 = vsyncpa [#allocation8], 1
    %1252 = vsyncpa [#allocation11], 1
    %1253 = vsyncpa [#allocation14], 1

</llo_original>
